<compile_context>
chip_gen: v7x
topology: tpu7x:2x2x1
jax: 0.10.0
libtpu: 0.0.40
codegen_flags: <defaults>
</compile_context>

<pallas_src>
import functools

import jax
import jax.numpy as jnp
from jax.experimental import pallas as pl
from jax.experimental.pallas import tpu as pltpu

LANE = 128
SUBLANE = 8


# ---------------------------------------------------------------------------
# small helpers
# ---------------------------------------------------------------------------
def _round_up(x, m):
    return ((x + m - 1) // m) * m


def _pad_to(x, shape):
    pads = [(0, s - d) for d, s in zip(x.shape, shape)]
    return jnp.pad(x, pads)


def _choose_m_tile(m):
    """Fixed-ish M tile: 256 for big M, else split so the grid has >=2 programs."""
    if m >= 512:
        return 256
    if m >= 16:
        return _round_up(-(-m // 2), SUBLANE)
    return _round_up(m, SUBLANE)


def _pick_t_chunk(seq, target=32):
    """Largest divisor of seq that is <= target."""
    c = min(seq, target)
    while seq % c:
        c -= 1
    return c


# ---------------------------------------------------------------------------
# Matmul + bias kernel (hoisted input projection and the FC).
# Grid (M, N, K); f32 accumulator in VMEM; bf16 MXU operands; bias added at
# the last K step. M/N axes are "parallel" (megacore), K is "arbitrary".
# ---------------------------------------------------------------------------
def matmul_bias_kernel(x_ref, w_ref, b_ref, o_ref, acc_ref):
    kk = pl.program_id(2)

    @pl.when(kk == 0)
    def _():
        acc_ref[...] = jnp.zeros_like(acc_ref)

    acc_ref[...] += jnp.dot(
        x_ref[...], w_ref[...], preferred_element_type=jnp.float32
    )

    @pl.when(kk == pl.num_programs(2) - 1)
    def _():
        o_ref[...] = (acc_ref[...] + b_ref[...]).astype(o_ref.dtype)


def matmul_bias(x, w_t, b, out_dtype=jnp.float32):
    """x: (M, K), w_t: (K, N), b: (1, N) f32  ->  (M, N) out_dtype."""
    m_orig, k_orig = x.shape
    n_orig = w_t.shape[1]

    x = x.astype(jnp.bfloat16)
    w_t = w_t.astype(jnp.bfloat16)
    b = b.astype(jnp.float32)

    # --- M: pad to a fixed tile (never one giant tile), >=2 programs when possible
    m_tile = _choose_m_tile(m_orig)
    m = _round_up(m_orig, m_tile)
    if m != m_orig:
        x = jnp.pad(x, ((0, m - m_orig), (0, 0)))

    # --- K: tile only when large; zero-padded K columns are mathematically exact
    k = k_orig
    k_tile = k if k <= 512 else 512
    if k % k_tile:
        k = _round_up(k, k_tile)
        x = jnp.pad(x, ((0, 0), (0, k - k_orig)))
        w_t = jnp.pad(w_t, ((0, k - k_orig), (0, 0)))

    # --- N: tile only when large
    n = n_orig
    n_tile = n if n <= 512 else 512
    if n % n_tile:
        n = _round_up(n, n_tile)
        w_t = jnp.pad(w_t, ((0, 0), (0, n - n_orig)))
        b = jnp.pad(b, ((0, 0), (0, n - n_orig)))

    out = pl.pallas_call(
        matmul_bias_kernel,
        out_shape=jax.ShapeDtypeStruct((m, n), out_dtype),
        grid_spec=pltpu.PrefetchScalarGridSpec(
            num_scalar_prefetch=0,
            grid=(m // m_tile, n // n_tile, k // k_tile),
            in_specs=[
                pl.BlockSpec((m_tile, k_tile), lambda i, j, kk: (i, kk)),
                pl.BlockSpec((k_tile, n_tile), lambda i, j, kk: (kk, j)),
                pl.BlockSpec((1, n_tile), lambda i, j, kk: (0, j)),
            ],
            out_specs=pl.BlockSpec((m_tile, n_tile), lambda i, j, kk: (i, j)),
            scratch_shapes=[pltpu.VMEM((m_tile, n_tile), jnp.float32)],
        ),
        compiler_params=pltpu.CompilerParams(
            dimension_semantics=("parallel", "parallel", "arbitrary")
        ),
    )(x, w_t, b)
    return out[:m_orig, :n_orig]


# ---------------------------------------------------------------------------
# RNN recurrence kernel: grid over time CHUNKS, hidden state carried in f32
# VMEM scratch. gates already contains x @ W_ih^T + b_ih + b_hh per timestep.
# W_hh is read once per chunk (loop-invariant); per-step dot uses bf16
# operands with f32 accumulation; gates/outputs are stored bf16.
# ---------------------------------------------------------------------------
def rnn_recurrence_kernel(gates_ref, whh_ref, out_ref, h_scratch, *, t_chunk):
    c = pl.program_id(0)

    @pl.when(c == 0)
    def _():
        # init_hidden: zeros
        h_scratch[...] = jnp.zeros_like(h_scratch)

    w = whh_ref[...]  # hoisted: loop-invariant bf16 weight, read once per chunk

    def step(t, h):
        g = gates_ref[t].astype(jnp.float32)  # (batch_pad, Hp)
        h_new = jnp.tanh(
            g + jnp.dot(h.astype(w.dtype), w, preferred_element_type=jnp.float32)
        )
        out_ref[t] = h_new.astype(out_ref.dtype)
        return h_new

    h_final = jax.lax.fori_loop(0, t_chunk, step, h_scratch[...], unroll=True)
    h_scratch[...] = h_final  # carry hidden state into the next chunk


def rnn_recurrence(gates_tbf, w_hh_t):
    """gates_tbf: (seq, batch_pad, Hp) bf16 time-major; w_hh_t: (Hp, Hp) bf16."""
    seq, batch, hp = gates_tbf.shape
    t_chunk = _pick_t_chunk(seq, target=32)
    return pl.pallas_call(
        functools.partial(rnn_recurrence_kernel, t_chunk=t_chunk),
        out_shape=jax.ShapeDtypeStruct((seq, batch, hp), jnp.bfloat16),
        grid_spec=pltpu.PrefetchScalarGridSpec(
            num_scalar_prefetch=0,
            grid=(seq // t_chunk,),
            in_specs=[
                pl.BlockSpec((t_chunk, batch, hp), lambda c: (c, 0, 0)),
                pl.BlockSpec((hp, hp), lambda c: (0, 0)),
            ],
            out_specs=pl.BlockSpec((t_chunk, batch, hp), lambda c: (c, 0, 0)),
            scratch_shapes=[pltpu.VMEM((batch, hp), jnp.float32)],
        ),
        compiler_params=pltpu.CompilerParams(
            dimension_semantics=("arbitrary",)  # sequential recurrence
        ),
    )(gates_tbf, w_hh_t)


# ---------------------------------------------------------------------------
# Parameter init (PyTorch-style shapes/init), pre-transposed, lane-padded,
# weights cast to bf16. Padded weight/bias COLUMNS are zero, so padded
# activation columns stay exactly zero through tanh.
# ---------------------------------------------------------------------------
def init_params(key, input_size, output_size, hidden_dim, n_layers):
    hp = _round_up(hidden_dim, LANE)
    op = _round_up(output_size, LANE)
    k = 1.0 / (hidden_dim ** 0.5)

    params = {"rnn": []}
    for layer in range(n_layers):
        in_sz = input_size if layer == 0 else hidden_dim
        in_sz_pad = input_size if layer == 0 else hp
        key, k1, k2, k3, k4 = jax.random.split(key, 5)
        w_ih = jax.random.uniform(k1, (hidden_dim, in_sz), jnp.float32, -k, k)
        w_hh = jax.random.uniform(k2, (hidden_dim, hidden_dim), jnp.float32, -k, k)
        b_ih = jax.random.uniform(k3, (hidden_dim,), jnp.float32, -k, k)
        b_hh = jax.random.uniform(k4, (hidden_dim,), jnp.float32, -k, k)
        w_ih_t = _pad_to(w_ih.T, (in_sz_pad, hp)).astype(jnp.bfloat16)
        w_hh_t = _pad_to(w_hh.T, (hp, hp)).astype(jnp.bfloat16)
        b = _pad_to((b_ih + b_hh).reshape(1, hidden_dim), (1, hp))  # f32
        params["rnn"].append((w_ih_t, w_hh_t, b))

    key, k5, k6 = jax.random.split(key, 3)
    fc_w = jax.random.uniform(k5, (output_size, hidden_dim), jnp.float32, -k, k)
    fc_b = jax.random.uniform(k6, (output_size,), jnp.float32, -k, k)
    params["fc_w_t"] = _pad_to(fc_w.T, (hp, op)).astype(jnp.bfloat16)
    params["fc_b"] = _pad_to(fc_b.reshape(1, output_size), (1, op))  # f32
    return params


# ---------------------------------------------------------------------------
# Model forward (glue in plain JAX).
# ---------------------------------------------------------------------------
@functools.partial(jax.jit, static_argnames=("hidden_dim", "output_size"))
def model_forward(x, params, hidden_dim, output_size):
    """x: (batch, seq, input_size) — batch_first, like the PyTorch module."""
    batch, seq, _ = x.shape

    # Pad batch to a full f32 sublane (8) so every per-step (batch, Hp) access
    # in the recurrence is an unmasked vreg; padded rows never interact with
    # real rows and are sliced off at the end.
    batch_pad = _round_up(batch, SUBLANE)
    if batch_pad != batch:
        x = jnp.pad(x, ((0, batch_pad - batch), (0, 0), (0, 0)))

    layer_in = jnp.transpose(x, (1, 0, 2)).astype(jnp.bfloat16)  # (seq, bp, feat)

    finals = []
    for (w_ih_t, w_hh_t, b) in params["rnn"]:
        in_feat = layer_in.shape[-1]
        # Hoisted input projection for all timesteps at once (bf16 gates).
        gates = matmul_bias(
            layer_in.reshape(seq * batch_pad, in_feat), w_ih_t, b,
            out_dtype=jnp.bfloat16,
        )
        gates = gates.reshape(seq, batch_pad, -1)
        layer_in = rnn_recurrence(gates, w_hh_t)  # (seq, bp, Hp) bf16
        finals.append(layer_in[-1, :batch, :hidden_dim].astype(jnp.float32))

    hidden = jnp.stack(finals, axis=0)  # (n_layers, batch, hidden_dim)

    # FC on time-major rows; only the tiny result gets reordered to batch-first.
    hp = layer_in.shape[-1]
    fc_out_tm = matmul_bias(
        layer_in.reshape(seq * batch_pad, hp),
        params["fc_w_t"], params["fc_b"], out_dtype=jnp.float32,
    )
    fc_out = fc_out_tm[:, :output_size].reshape(seq, batch_pad, output_size)
    out = jnp.transpose(fc_out, (1, 0, 2))[:batch].reshape(batch * seq, output_size)
    return out, hidden


# ---------------------------------------------------------------------------
# Pure-JAX f32 reference (same padded params, lax.scan) for a sanity check.
# Kernel path uses bf16 storage/operands -> compare with loose tolerance.
# ---------------------------------------------------------------------------
def reference_forward(x, params, hidden_dim, output_size):
    batch, seq, _ = x.shape
    layer_in = jnp.transpose(x, (1, 0, 2)).astype(jnp.float32)
    finals = []
    for (w_ih_t, w_hh_t, b) in params["rnn"]:
        w_ih_f = w_ih_t.astype(jnp.float32)
        w_hh_f = w_hh_t.astype(jnp.float32)
        hp = w_hh_f.shape[0]

        def step(h, x_t, w_ih_f=w_ih_f, w_hh_f=w_hh_f, b=b):
            h_new = jnp.tanh(x_t @ w_ih_f + h @ w_hh_f + b)
            return h_new, h_new

        _, outs = jax.lax.scan(step, jnp.zeros((batch, hp), jnp.float32), layer_in)
        finals.append(outs[-1, :, :hidden_dim])
        layer_in = outs
    hidden = jnp.stack(finals, axis=0)
    out_bf = jnp.transpose(layer_in, (1, 0, 2)).reshape(batch * seq, -1)
    out = (out_bf @ params["fc_w_t"].astype(jnp.float32)
           + params["fc_b"])[:, :output_size]
    return out, hidden


if __name__ == "__main__":
    batch, seq = 2, 8
    input_size, hidden_dim, output_size, n_layers = 4, 32, 4, 2

    key = jax.random.PRNGKey(0)
    key, pkey, xkey = jax.random.split(key, 3)
    params = init_params(pkey, input_size, output_size, hidden_dim, n_layers)
    x = jax.random.normal(xkey, (batch, seq, input_size), jnp.float32)

    out, hidden = model_forward(x, params, hidden_dim, output_size)
    jax.block_until_ready((out, hidden))

    assert out.shape == (batch * seq, output_size), out.shape
    assert hidden.shape == (n_layers, batch, hidden_dim), hidden.shape
    assert bool(jnp.all(jnp.isfinite(out))) and bool(jnp.all(jnp.isfinite(hidden)))

    out_ref, hidden_ref = reference_forward(x, params, hidden_dim, output_size)
    # bf16 storage/operands in the kernel path vs f32 reference -> loose tol.
    assert jnp.allclose(out, out_ref, atol=5e-2, rtol=5e-2)
    assert jnp.allclose(hidden, hidden_ref, atol=5e-2, rtol=5e-2)

    print("KERNEL_OK")
</pallas_src>

<mosaic_0001>
module attributes {stable_mosaic.version = 11 : i64} {
  func.func @matmul_bias_kernel(%arg0: i32, %arg1: i32, %arg2: i32, %arg3: memref<32x4xbf16, #tpu.memory_space<vmem>>, %arg4: memref<4x128xbf16, #tpu.memory_space<vmem>>, %arg5: memref<1x128xf32, #tpu.memory_space<vmem>>, %arg6: memref<32x128xbf16, #tpu.memory_space<vmem>>, %arg7: memref<32x128xf32, #tpu.memory_space<vmem>>) attributes {dimension_semantics = [#tpu.dimension_semantics<parallel>, #tpu.dimension_semantics<parallel>, #tpu.dimension_semantics<arbitrary>], iteration_bounds = array<i64: 2, 1, 1>, scalar_prefetch = 0 : i64, scratch_operands = 1 : i64, tpu.core_type = #tpu.core_type<tc>, window_params = [{transform_indices = @transform_0, window_bounds = array<i64: 32, 4>}, {transform_indices = @transform_1, window_bounds = array<i64: 4, 128>}, {transform_indices = @transform_2, window_bounds = array<i64: 1, 128>}, {transform_indices = @transform_3, window_bounds = array<i64: 32, 128>}]} {
    %c0_i32 = arith.constant 0 : i32
    %0 = arith.cmpi eq, %arg2, %c0_i32 : i32
    %1 = arith.extui %0 : i1 to i32
    %c0_i32_0 = arith.constant 0 : i32
    %2 = arith.cmpi ne, %1, %c0_i32_0 : i32
    scf.if %2 {
      %cst_10 = arith.constant 0.000000e+00 : f32
      %12 = vector.broadcast %cst_10 : f32 to vector<32x128xf32>
      %c0_11 = arith.constant 0 : index
      %c0_12 = arith.constant 0 : index
      %13 = vector.load %arg7[%c0_11, %c0_12] : memref<32x128xf32, #tpu.memory_space<vmem>>, vector<32x128xf32>
      tpu.vector_store %arg7[%c0_11, %c0_12], %12 {strides = array<i32>} : memref<32x128xf32, #tpu.memory_space<vmem>>, vector<32x128xf32>,
    } else {
    }
    %c0 = arith.constant 0 : index
    %c0_1 = arith.constant 0 : index
    %3 = vector.load %arg7[%c0, %c0_1] : memref<32x128xf32, #tpu.memory_space<vmem>>, vector<32x128xf32>
    %c0_2 = arith.constant 0 : index
    %c0_3 = arith.constant 0 : index
    %4 = vector.load %arg3[%c0_2, %c0_3] : memref<32x4xbf16, #tpu.memory_space<vmem>>, vector<32x4xbf16>
    %c0_4 = arith.constant 0 : index
    %c0_5 = arith.constant 0 : index
    %5 = vector.load %arg4[%c0_4, %c0_5] : memref<4x128xbf16, #tpu.memory_space<vmem>>, vector<4x128xbf16>
    %cst = arith.constant dense<0.000000e+00> : vector<32x128xf32>
    %6 = tpu.matmul %4, %5, %cst {dimension_numbers = #tpu.dot_dimension_numbers<[1], [0], [0], [1], [0, 0, 1, 1], [], []>} : vector<32x4xbf16>, vector<4x128xbf16>, vector<32x128xf32> -> vector<32x128xf32>
    %7 = arith.addf %3, %6 : vector<32x128xf32>
    %c0_6 = arith.constant 0 : index
    %c0_7 = arith.constant 0 : index
    %8 = vector.load %arg7[%c0_6, %c0_7] : memref<32x128xf32, #tpu.memory_space<vmem>>, vector<32x128xf32>
    tpu.vector_store %arg7[%c0_6, %c0_7], %7 {strides = array<i32>} : memref<32x128xf32, #tpu.memory_space<vmem>>, vector<32x128xf32>,
    %c0_i32_8 = arith.constant 0 : i32
    %9 = arith.cmpi eq, %arg2, %c0_i32_8 : i32
    %10 = arith.extui %9 : i1 to i32
    %c0_i32_9 = arith.constant 0 : i32
    %11 = arith.cmpi ne, %10, %c0_i32_9 : i32
    scf.if %11 {
      %c0_10 = arith.constant 0 : index
      %c0_11 = arith.constant 0 : index
      %12 = vector.load %arg7[%c0_10, %c0_11] : memref<32x128xf32, #tpu.memory_space<vmem>>, vector<32x128xf32>
      %c0_12 = arith.constant 0 : index
      %c0_13 = arith.constant 0 : index
      %13 = vector.load %arg5[%c0_12, %c0_13] : memref<1x128xf32, #tpu.memory_space<vmem>>, vector<1x128xf32>
      %14 = vector.broadcast %13 : vector<1x128xf32> to vector<32x128xf32>
      %15 = arith.addf %12, %14 : vector<32x128xf32>
      %16 = arith.truncf %15 : vector<32x128xf32> to vector<32x128xbf16>
      %c0_14 = arith.constant 0 : index
      %c0_15 = arith.constant 0 : index
      %17 = vector.load %arg6[%c0_14, %c0_15] : memref<32x128xbf16, #tpu.memory_space<vmem>>, vector<32x128xbf16>
      tpu.vector_store %arg6[%c0_14, %c0_15], %16 {strides = array<i32>} : memref<32x128xbf16, #tpu.memory_space<vmem>>, vector<32x128xbf16>,
    } else {
    }
    return
  }
  func.func @transform_0(%arg0: i32, %arg1: i32, %arg2: i32) -> (i32, i32) {
    %c0_i32 = arith.constant 0 : i32
    return %arg0, %arg2 : i32, i32
  }
  func.func @transform_1(%arg0: i32, %arg1: i32, %arg2: i32) -> (i32, i32) {
    %c0_i32 = arith.constant 0 : i32
    return %arg2, %arg1 : i32, i32
  }
  func.func @transform_2(%arg0: i32, %arg1: i32, %arg2: i32) -> (i32, i32) {
    %c0_i32 = arith.constant 0 : i32
    %c0_i32_0 = arith.constant 0 : i32
    return %c0_i32, %arg1 : i32, i32
  }
  func.func @transform_3(%arg0: i32, %arg1: i32, %arg2: i32) -> (i32, i32) {
    %c0_i32 = arith.constant 0 : i32
    return %arg0, %arg1 : i32, i32
  }
}

module attributes {stable_mosaic.version = 11 : i64} {
  func.func @rnn_recurrence_kernel(%arg0: i32, %arg1: memref<8x8x128xbf16, #tpu.memory_space<vmem>>, %arg2: memref<128x128xbf16, #tpu.memory_space<vmem>>, %arg3: memref<8x8x128xbf16, #tpu.memory_space<vmem>>, %arg4: memref<8x128xf32, #tpu.memory_space<vmem>>) attributes {dimension_semantics = [#tpu.dimension_semantics<arbitrary>], iteration_bounds = array<i64: 1>, scalar_prefetch = 0 : i64, scratch_operands = 1 : i64, tpu.core_type = #tpu.core_type<tc>, window_params = [{transform_indices = @transform_0, window_bounds = array<i64: 8, 8, 128>}, {pipeline_mode = #tpu.pipeline_mode<synchronous>, transform_indices = @transform_1, window_bounds = array<i64: 128, 128>}, {transform_indices = @transform_2, window_bounds = array<i64: 8, 8, 128>}]} {
    %c0_i32 = arith.constant 0 : i32
    %0 = arith.cmpi eq, %arg0, %c0_i32 : i32
    %1 = arith.extui %0 : i1 to i32
    %c0_i32_0 = arith.constant 0 : i32
    %2 = arith.cmpi ne, %1, %c0_i32_0 : i32
    scf.if %2 {
      %cst_46 = arith.constant 0.000000e+00 : f32
      %110 = vector.broadcast %cst_46 : f32 to vector<8x128xf32>
      %c0_47 = arith.constant 0 : index
      %c0_48 = arith.constant 0 : index
      %111 = vector.load %arg4[%c0_47, %c0_48] : memref<8x128xf32, #tpu.memory_space<vmem>>, vector<8x128xf32>
      tpu.vector_store %arg4[%c0_47, %c0_48], %110 {strides = array<i32>} : memref<8x128xf32, #tpu.memory_space<vmem>>, vector<8x128xf32>,
    } else {
    }
    %c0 = arith.constant 0 : index
    %c0_1 = arith.constant 0 : index
    %3 = vector.load %arg2[%c0, %c0_1] : memref<128x128xbf16, #tpu.memory_space<vmem>>, vector<128x128xbf16>
    %c0_2 = arith.constant 0 : index
    %c0_3 = arith.constant 0 : index
    %4 = vector.load %arg4[%c0_2, %c0_3] : memref<8x128xf32, #tpu.memory_space<vmem>>, vector<8x128xf32>
    %c0_i32_4 = arith.constant 0 : i32
    %5 = arith.index_cast %c0_i32_4 : i32 to index
    %c0_5 = arith.constant 0 : index
    %c0_6 = arith.constant 0 : index
    %6 = vector.load %arg1[%5, %c0_5, %c0_6] : memref<8x8x128xbf16, #tpu.memory_space<vmem>>, vector<1x8x128xbf16>
    %7 = vector.shape_cast %6 : vector<1x8x128xbf16> to vector<8x128xbf16>
    %8 = arith.extf %7 : vector<8x128xbf16> to vector<8x128xf32>
    %9 = arith.truncf %4 : vector<8x128xf32> to vector<8x128xbf16>
    %cst = arith.constant dense<0.000000e+00> : vector<8x128xf32>
    %10 = tpu.matmul %9, %3, %cst {dimension_numbers = #tpu.dot_dimension_numbers<[1], [0], [0], [1], [0, 0, 1, 1], [], []>} : vector<8x128xbf16>, vector<128x128xbf16>, vector<8x128xf32> -> vector<8x128xf32>
    %11 = arith.addf %8, %10 : vector<8x128xf32>
    %12 = math.tanh %11 : vector<8x128xf32>
    %13 = arith.truncf %12 : vector<8x128xf32> to vector<8x128xbf16>
    %14 = arith.index_cast %c0_i32_4 : i32 to index
    %c0_7 = arith.constant 0 : index
    %c0_8 = arith.constant 0 : index
    %15 = vector.load %arg3[%14, %c0_7, %c0_8] : memref<8x8x128xbf16, #tpu.memory_space<vmem>>, vector<1x8x128xbf16>
    %16 = vector.shape_cast %15 : vector<1x8x128xbf16> to vector<8x128xbf16>
    %17 = vector.shape_cast %13 : vector<8x128xbf16> to vector<1x8x128xbf16>
    tpu.vector_store %arg3[%14, %c0_7, %c0_8], %17 {strides = array<i32>} : memref<8x8x128xbf16, #tpu.memory_space<vmem>>, vector<1x8x128xbf16>,
    %c1_i32 = arith.constant 1 : i32
    %18 = arith.index_cast %c1_i32 : i32 to index
    %c0_9 = arith.constant 0 : index
    %c0_10 = arith.constant 0 : index
    %19 = vector.load %arg1[%18, %c0_9, %c0_10] : memref<8x8x128xbf16, #tpu.memory_space<vmem>>, vector<1x8x128xbf16>
    %20 = vector.shape_cast %19 : vector<1x8x128xbf16> to vector<8x128xbf16>
    %21 = arith.extf %20 : vector<8x128xbf16> to vector<8x128xf32>
    %22 = arith.truncf %12 : vector<8x128xf32> to vector<8x128xbf16>
    %cst_11 = arith.constant dense<0.000000e+00> : vector<8x128xf32>
    %23 = tpu.matmul %22, %3, %cst_11 {dimension_numbers = #tpu.dot_dimension_numbers<[1], [0], [0], [1], [0, 0, 1, 1], [], []>} : vector<8x128xbf16>, vector<128x128xbf16>, vector<8x128xf32> -> vector<8x128xf32>
    %24 = arith.addf %21, %23 : vector<8x128xf32>
    %25 = math.tanh %24 : vector<8x128xf32>
    %26 = arith.truncf %25 : vector<8x128xf32> to vector<8x128xbf16>
    %27 = arith.index_cast %c1_i32 : i32 to index
    %c0_12 = arith.constant 0 : index
    %c0_13 = arith.constant 0 : index
    %28 = vector.load %arg3[%27, %c0_12, %c0_13] : memref<8x8x128xbf16, #tpu.memory_space<vmem>>, vector<1x8x128xbf16>
    %29 = vector.shape_cast %28 : vector<1x8x128xbf16> to vector<8x128xbf16>
    %30 = vector.shape_cast %26 : vector<8x128xbf16> to vector<1x8x128xbf16>
    tpu.vector_store %arg3[%27, %c0_12, %c0_13], %30 {strides = array<i32>} : memref<8x8x128xbf16, #tpu.memory_space<vmem>>, vector<1x8x128xbf16>,
    %c2_i32 = arith.constant 2 : i32
    %31 = arith.index_cast %c2_i32 : i32 to index
    %c0_14 = arith.constant 0 : index
    %c0_15 = arith.constant 0 : index
    %32 = vector.load %arg1[%31, %c0_14, %c0_15] : memref<8x8x128xbf16, #tpu.memory_space<vmem>>, vector<1x8x128xbf16>
    %33 = vector.shape_cast %32 : vector<1x8x128xbf16> to vector<8x128xbf16>
    %34 = arith.extf %33 : vector<8x128xbf16> to vector<8x128xf32>
    %35 = arith.truncf %25 : vector<8x128xf32> to vector<8x128xbf16>
    %cst_16 = arith.constant dense<0.000000e+00> : vector<8x128xf32>
    %36 = tpu.matmul %35, %3, %cst_16 {dimension_numbers = #tpu.dot_dimension_numbers<[1], [0], [0], [1], [0, 0, 1, 1], [], []>} : vector<8x128xbf16>, vector<128x128xbf16>, vector<8x128xf32> -> vector<8x128xf32>
    %37 = arith.addf %34, %36 : vector<8x128xf32>
    %38 = math.tanh %37 : vector<8x128xf32>
    %39 = arith.truncf %38 : vector<8x128xf32> to vector<8x128xbf16>
    %40 = arith.index_cast %c2_i32 : i32 to index
    %c0_17 = arith.constant 0 : index
    %c0_18 = arith.constant 0 : index
    %41 = vector.load %arg3[%40, %c0_17, %c0_18] : memref<8x8x128xbf16, #tpu.memory_space<vmem>>, vector<1x8x128xbf16>
    %42 = vector.shape_cast %41 : vector<1x8x128xbf16> to vector<8x128xbf16>
    %43 = vector.shape_cast %39 : vector<8x128xbf16> to vector<1x8x128xbf16>
    tpu.vector_store %arg3[%40, %c0_17, %c0_18], %43 {strides = array<i32>} : memref<8x8x128xbf16, #tpu.memory_space<vmem>>, vector<1x8x128xbf16>,
    %c3_i32 = arith.constant 3 : i32
    %44 = arith.index_cast %c3_i32 : i32 to index
    %c0_19 = arith.constant 0 : index
    %c0_20 = arith.constant 0 : index
    %45 = vector.load %arg1[%44, %c0_19, %c0_20] : memref<8x8x128xbf16, #tpu.memory_space<vmem>>, vector<1x8x128xbf16>
    %46 = vector.shape_cast %45 : vector<1x8x128xbf16> to vector<8x128xbf16>
    %47 = arith.extf %46 : vector<8x128xbf16> to vector<8x128xf32>
    %48 = arith.truncf %38 : vector<8x128xf32> to vector<8x128xbf16>
    %cst_21 = arith.constant dense<0.000000e+00> : vector<8x128xf32>
    %49 = tpu.matmul %48, %3, %cst_21 {dimension_numbers = #tpu.dot_dimension_numbers<[1], [0], [0], [1], [0, 0, 1, 1], [], []>} : vector<8x128xbf16>, vector<128x128xbf16>, vector<8x128xf32> -> vector<8x128xf32>
    %50 = arith.addf %47, %49 : vector<8x128xf32>
    %51 = math.tanh %50 : vector<8x128xf32>
    %52 = arith.truncf %51 : vector<8x128xf32> to vector<8x128xbf16>
    %53 = arith.index_cast %c3_i32 : i32 to index
    %c0_22 = arith.constant 0 : index
    %c0_23 = arith.constant 0 : index
    %54 = vector.load %arg3[%53, %c0_22, %c0_23] : memref<8x8x128xbf16, #tpu.memory_space<vmem>>, vector<1x8x128xbf16>
    %55 = vector.shape_cast %54 : vector<1x8x128xbf16> to vector<8x128xbf16>
    %56 = vector.shape_cast %52 : vector<8x128xbf16> to vector<1x8x128xbf16>
    tpu.vector_store %arg3[%53, %c0_22, %c0_23], %56 {strides = array<i32>} : memref<8x8x128xbf16, #tpu.memory_space<vmem>>, vector<1x8x128xbf16>,
    %c4_i32 = arith.constant 4 : i32
    %57 = arith.index_cast %c4_i32 : i32 to index
    %c0_24 = arith.constant 0 : index
    %c0_25 = arith.constant 0 : index
    %58 = vector.load %arg1[%57, %c0_24, %c0_25] : memref<8x8x128xbf16, #tpu.memory_space<vmem>>, vector<1x8x128xbf16>
    %59 = vector.shape_cast %58 : vector<1x8x128xbf16> to vector<8x128xbf16>
    %60 = arith.extf %59 : vector<8x128xbf16> to vector<8x128xf32>
    %61 = arith.truncf %51 : vector<8x128xf32> to vector<8x128xbf16>
    %cst_26 = arith.constant dense<0.000000e+00> : vector<8x128xf32>
    %62 = tpu.matmul %61, %3, %cst_26 {dimension_numbers = #tpu.dot_dimension_numbers<[1], [0], [0], [1], [0, 0, 1, 1], [], []>} : vector<8x128xbf16>, vector<128x128xbf16>, vector<8x128xf32> -> vector<8x128xf32>
    %63 = arith.addf %60, %62 : vector<8x128xf32>
    %64 = math.tanh %63 : vector<8x128xf32>
    %65 = arith.truncf %64 : vector<8x128xf32> to vector<8x128xbf16>
    %66 = arith.index_cast %c4_i32 : i32 to index
    %c0_27 = arith.constant 0 : index
    %c0_28 = arith.constant 0 : index
    %67 = vector.load %arg3[%66, %c0_27, %c0_28] : memref<8x8x128xbf16, #tpu.memory_space<vmem>>, vector<1x8x128xbf16>
    %68 = vector.shape_cast %67 : vector<1x8x128xbf16> to vector<8x128xbf16>
    %69 = vector.shape_cast %65 : vector<8x128xbf16> to vector<1x8x128xbf16>
    tpu.vector_store %arg3[%66, %c0_27, %c0_28], %69 {strides = array<i32>} : memref<8x8x128xbf16, #tpu.memory_space<vmem>>, vector<1x8x128xbf16>,
    %c5_i32 = arith.constant 5 : i32
    %70 = arith.index_cast %c5_i32 : i32 to index
    %c0_29 = arith.constant 0 : index
    %c0_30 = arith.constant 0 : index
    %71 = vector.load %arg1[%70, %c0_29, %c0_30] : memref<8x8x128xbf16, #tpu.memory_space<vmem>>, vector<1x8x128xbf16>
    %72 = vector.shape_cast %71 : vector<1x8x128xbf16> to vector<8x128xbf16>
    %73 = arith.extf %72 : vector<8x128xbf16> to vector<8x128xf32>
    %74 = arith.truncf %64 : vector<8x128xf32> to vector<8x128xbf16>
    %cst_31 = arith.constant dense<0.000000e+00> : vector<8x128xf32>
    %75 = tpu.matmul %74, %3, %cst_31 {dimension_numbers = #tpu.dot_dimension_numbers<[1], [0], [0], [1], [0, 0, 1, 1], [], []>} : vector<8x128xbf16>, vector<128x128xbf16>, vector<8x128xf32> -> vector<8x128xf32>
    %76 = arith.addf %73, %75 : vector<8x128xf32>
    %77 = math.tanh %76 : vector<8x128xf32>
    %78 = arith.truncf %77 : vector<8x128xf32> to vector<8x128xbf16>
    %79 = arith.index_cast %c5_i32 : i32 to index
    %c0_32 = arith.constant 0 : index
    %c0_33 = arith.constant 0 : index
    %80 = vector.load %arg3[%79, %c0_32, %c0_33] : memref<8x8x128xbf16, #tpu.memory_space<vmem>>, vector<1x8x128xbf16>
    %81 = vector.shape_cast %80 : vector<1x8x128xbf16> to vector<8x128xbf16>
    %82 = vector.shape_cast %78 : vector<8x128xbf16> to vector<1x8x128xbf16>
    tpu.vector_store %arg3[%79, %c0_32, %c0_33], %82 {strides = array<i32>} : memref<8x8x128xbf16, #tpu.memory_space<vmem>>, vector<1x8x128xbf16>,
    %c6_i32 = arith.constant 6 : i32
    %83 = arith.index_cast %c6_i32 : i32 to index
    %c0_34 = arith.constant 0 : index
    %c0_35 = arith.constant 0 : index
    %84 = vector.load %arg1[%83, %c0_34, %c0_35] : memref<8x8x128xbf16, #tpu.memory_space<vmem>>, vector<1x8x128xbf16>
    %85 = vector.shape_cast %84 : vector<1x8x128xbf16> to vector<8x128xbf16>
    %86 = arith.extf %85 : vector<8x128xbf16> to vector<8x128xf32>
    %87 = arith.truncf %77 : vector<8x128xf32> to vector<8x128xbf16>
    %cst_36 = arith.constant dense<0.000000e+00> : vector<8x128xf32>
    %88 = tpu.matmul %87, %3, %cst_36 {dimension_numbers = #tpu.dot_dimension_numbers<[1], [0], [0], [1], [0, 0, 1, 1], [], []>} : vector<8x128xbf16>, vector<128x128xbf16>, vector<8x128xf32> -> vector<8x128xf32>
    %89 = arith.addf %86, %88 : vector<8x128xf32>
    %90 = math.tanh %89 : vector<8x128xf32>
    %91 = arith.truncf %90 : vector<8x128xf32> to vector<8x128xbf16>
    %92 = arith.index_cast %c6_i32 : i32 to index
    %c0_37 = arith.constant 0 : index
    %c0_38 = arith.constant 0 : index
    %93 = vector.load %arg3[%92, %c0_37, %c0_38] : memref<8x8x128xbf16, #tpu.memory_space<vmem>>, vector<1x8x128xbf16>
    %94 = vector.shape_cast %93 : vector<1x8x128xbf16> to vector<8x128xbf16>
    %95 = vector.shape_cast %91 : vector<8x128xbf16> to vector<1x8x128xbf16>
    tpu.vector_store %arg3[%92, %c0_37, %c0_38], %95 {strides = array<i32>} : memref<8x8x128xbf16, #tpu.memory_space<vmem>>, vector<1x8x128xbf16>,
    %c7_i32 = arith.constant 7 : i32
    %96 = arith.index_cast %c7_i32 : i32 to index
    %c0_39 = arith.constant 0 : index
    %c0_40 = arith.constant 0 : index
    %97 = vector.load %arg1[%96, %c0_39, %c0_40] : memref<8x8x128xbf16, #tpu.memory_space<vmem>>, vector<1x8x128xbf16>
    %98 = vector.shape_cast %97 : vector<1x8x128xbf16> to vector<8x128xbf16>
    %99 = arith.extf %98 : vector<8x128xbf16> to vector<8x128xf32>
    %100 = arith.truncf %90 : vector<8x128xf32> to vector<8x128xbf16>
    %cst_41 = arith.constant dense<0.000000e+00> : vector<8x128xf32>
    %101 = tpu.matmul %100, %3, %cst_41 {dimension_numbers = #tpu.dot_dimension_numbers<[1], [0], [0], [1], [0, 0, 1, 1], [], []>} : vector<8x128xbf16>, vector<128x128xbf16>, vector<8x128xf32> -> vector<8x128xf32>
    %102 = arith.addf %99, %101 : vector<8x128xf32>
    %103 = math.tanh %102 : vector<8x128xf32>
    %104 = arith.truncf %103 : vector<8x128xf32> to vector<8x128xbf16>
    %105 = arith.index_cast %c7_i32 : i32 to index
    %c0_42 = arith.constant 0 : index
    %c0_43 = arith.constant 0 : index
    %106 = vector.load %arg3[%105, %c0_42, %c0_43] : memref<8x8x128xbf16, #tpu.memory_space<vmem>>, vector<1x8x128xbf16>
    %107 = vector.shape_cast %106 : vector<1x8x128xbf16> to vector<8x128xbf16>
    %108 = vector.shape_cast %104 : vector<8x128xbf16> to vector<1x8x128xbf16>
    tpu.vector_store %arg3[%105, %c0_42, %c0_43], %108 {strides = array<i32>} : memref<8x8x128xbf16, #tpu.memory_space<vmem>>, vector<1x8x128xbf16>,
    %c8_i32 = arith.constant 8 : i32
    %c0_44 = arith.constant 0 : index
    %c0_45 = arith.constant 0 : index
    %109 = vector.load %arg4[%c0_44, %c0_45] : memref<8x128xf32, #tpu.memory_space<vmem>>, vector<8x128xf32>
    tpu.vector_store %arg4[%c0_44, %c0_45], %103 {strides = array<i32>} : memref<8x128xf32, #tpu.memory_space<vmem>>, vector<8x128xf32>,
    return
  }
  func.func @transform_0(%arg0: i32) -> (i32, i32, i32) {
    %c0_i32 = arith.constant 0 : i32
    %c0_i32_0 = arith.constant 0 : i32
    %c0_i32_1 = arith.constant 0 : i32
    return %arg0, %c0_i32, %c0_i32_0 : i32, i32, i32
  }
  func.func @transform_1(%arg0: i32) -> (i32, i32) {
    %c0_i32 = arith.constant 0 : i32
    %c0_i32_0 = arith.constant 0 : i32
    %c0_i32_1 = arith.constant 0 : i32
    return %c0_i32, %c0_i32_0 : i32, i32
  }
  func.func @transform_2(%arg0: i32) -> (i32, i32, i32) {
    %c0_i32 = arith.constant 0 : i32
    %c0_i32_0 = arith.constant 0 : i32
    %c0_i32_1 = arith.constant 0 : i32
    return %arg0, %c0_i32, %c0_i32_0 : i32, i32, i32
  }
}

module attributes {stable_mosaic.version = 11 : i64} {
  func.func @matmul_bias_kernel(%arg0: i32, %arg1: i32, %arg2: i32, %arg3: memref<32x128xbf16, #tpu.memory_space<vmem>>, %arg4: memref<128x128xbf16, #tpu.memory_space<vmem>>, %arg5: memref<1x128xf32, #tpu.memory_space<vmem>>, %arg6: memref<32x128xbf16, #tpu.memory_space<vmem>>, %arg7: memref<32x128xf32, #tpu.memory_space<vmem>>) attributes {dimension_semantics = [#tpu.dimension_semantics<parallel>, #tpu.dimension_semantics<parallel>, #tpu.dimension_semantics<arbitrary>], iteration_bounds = array<i64: 2, 1, 1>, scalar_prefetch = 0 : i64, scratch_operands = 1 : i64, tpu.core_type = #tpu.core_type<tc>, window_params = [{transform_indices = @transform_0, window_bounds = array<i64: 32, 128>}, {transform_indices = @transform_1, window_bounds = array<i64: 128, 128>}, {transform_indices = @transform_2, window_bounds = array<i64: 1, 128>}, {transform_indices = @transform_3, window_bounds = array<i64: 32, 128>}]} {
    %c0_i32 = arith.constant 0 : i32
    %0 = arith.cmpi eq, %arg2, %c0_i32 : i32
    %1 = arith.extui %0 : i1 to i32
    %c0_i32_0 = arith.constant 0 : i32
    %2 = arith.cmpi ne, %1, %c0_i32_0 : i32
    scf.if %2 {
      %cst_10 = arith.constant 0.000000e+00 : f32
      %12 = vector.broadcast %cst_10 : f32 to vector<32x128xf32>
      %c0_11 = arith.constant 0 : index
      %c0_12 = arith.constant 0 : index
      %13 = vector.load %arg7[%c0_11, %c0_12] : memref<32x128xf32, #tpu.memory_space<vmem>>, vector<32x128xf32>
      tpu.vector_store %arg7[%c0_11, %c0_12], %12 {strides = array<i32>} : memref<32x128xf32, #tpu.memory_space<vmem>>, vector<32x128xf32>,
    } else {
    }
    %c0 = arith.constant 0 : index
    %c0_1 = arith.constant 0 : index
    %3 = vector.load %arg7[%c0, %c0_1] : memref<32x128xf32, #tpu.memory_space<vmem>>, vector<32x128xf32>
    %c0_2 = arith.constant 0 : index
    %c0_3 = arith.constant 0 : index
    %4 = vector.load %arg3[%c0_2, %c0_3] : memref<32x128xbf16, #tpu.memory_space<vmem>>, vector<32x128xbf16>
    %c0_4 = arith.constant 0 : index
    %c0_5 = arith.constant 0 : index
    %5 = vector.load %arg4[%c0_4, %c0_5] : memref<128x128xbf16, #tpu.memory_space<vmem>>, vector<128x128xbf16>
    %cst = arith.constant dense<0.000000e+00> : vector<32x128xf32>
    %6 = tpu.matmul %4, %5, %cst {dimension_numbers = #tpu.dot_dimension_numbers<[1], [0], [0], [1], [0, 0, 1, 1], [], []>} : vector<32x128xbf16>, vector<128x128xbf16>, vector<32x128xf32> -> vector<32x128xf32>
    %7 = arith.addf %3, %6 : vector<32x128xf32>
    %c0_6 = arith.constant 0 : index
    %c0_7 = arith.constant 0 : index
    %8 = vector.load %arg7[%c0_6, %c0_7] : memref<32x128xf32, #tpu.memory_space<vmem>>, vector<32x128xf32>
    tpu.vector_store %arg7[%c0_6, %c0_7], %7 {strides = array<i32>} : memref<32x128xf32, #tpu.memory_space<vmem>>, vector<32x128xf32>,
    %c0_i32_8 = arith.constant 0 : i32
    %9 = arith.cmpi eq, %arg2, %c0_i32_8 : i32
    %10 = arith.extui %9 : i1 to i32
    %c0_i32_9 = arith.constant 0 : i32
    %11 = arith.cmpi ne, %10, %c0_i32_9 : i32
    scf.if %11 {
      %c0_10 = arith.constant 0 : index
      %c0_11 = arith.constant 0 : index
      %12 = vector.load %arg7[%c0_10, %c0_11] : memref<32x128xf32, #tpu.memory_space<vmem>>, vector<32x128xf32>
      %c0_12 = arith.constant 0 : index
      %c0_13 = arith.constant 0 : index
      %13 = vector.load %arg5[%c0_12, %c0_13] : memref<1x128xf32, #tpu.memory_space<vmem>>, vector<1x128xf32>
      %14 = vector.broadcast %13 : vector<1x128xf32> to vector<32x128xf32>
      %15 = arith.addf %12, %14 : vector<32x128xf32>
      %16 = arith.truncf %15 : vector<32x128xf32> to vector<32x128xbf16>
      %c0_14 = arith.constant 0 : index
      %c0_15 = arith.constant 0 : index
      %17 = vector.load %arg6[%c0_14, %c0_15] : memref<32x128xbf16, #tpu.memory_space<vmem>>, vector<32x128xbf16>
      tpu.vector_store %arg6[%c0_14, %c0_15], %16 {strides = array<i32>} : memref<32x128xbf16, #tpu.memory_space<vmem>>, vector<32x128xbf16>,
    } else {
    }
    return
  }
  func.func @transform_0(%arg0: i32, %arg1: i32, %arg2: i32) -> (i32, i32) {
    %c0_i32 = arith.constant 0 : i32
    return %arg0, %arg2 : i32, i32
  }
  func.func @transform_1(%arg0: i32, %arg1: i32, %arg2: i32) -> (i32, i32) {
    %c0_i32 = arith.constant 0 : i32
    return %arg2, %arg1 : i32, i32
  }
  func.func @transform_2(%arg0: i32, %arg1: i32, %arg2: i32) -> (i32, i32) {
    %c0_i32 = arith.constant 0 : i32
    %c0_i32_0 = arith.constant 0 : i32
    return %c0_i32, %arg1 : i32, i32
  }
  func.func @transform_3(%arg0: i32, %arg1: i32, %arg2: i32) -> (i32, i32) {
    %c0_i32 = arith.constant 0 : i32
    return %arg0, %arg1 : i32, i32
  }
}

module attributes {stable_mosaic.version = 11 : i64} {
  func.func @matmul_bias_kernel(%arg0: i32, %arg1: i32, %arg2: i32, %arg3: memref<32x128xbf16, #tpu.memory_space<vmem>>, %arg4: memref<128x128xbf16, #tpu.memory_space<vmem>>, %arg5: memref<1x128xf32, #tpu.memory_space<vmem>>, %arg6: memref<32x128xf32, #tpu.memory_space<vmem>>, %arg7: memref<32x128xf32, #tpu.memory_space<vmem>>) attributes {dimension_semantics = [#tpu.dimension_semantics<parallel>, #tpu.dimension_semantics<parallel>, #tpu.dimension_semantics<arbitrary>], iteration_bounds = array<i64: 2, 1, 1>, scalar_prefetch = 0 : i64, scratch_operands = 1 : i64, tpu.core_type = #tpu.core_type<tc>, window_params = [{transform_indices = @transform_0, window_bounds = array<i64: 32, 128>}, {transform_indices = @transform_1, window_bounds = array<i64: 128, 128>}, {transform_indices = @transform_2, window_bounds = array<i64: 1, 128>}, {transform_indices = @transform_3, window_bounds = array<i64: 32, 128>}]} {
    %c0_i32 = arith.constant 0 : i32
    %0 = arith.cmpi eq, %arg2, %c0_i32 : i32
    %1 = arith.extui %0 : i1 to i32
    %c0_i32_0 = arith.constant 0 : i32
    %2 = arith.cmpi ne, %1, %c0_i32_0 : i32
    scf.if %2 {
      %cst_10 = arith.constant 0.000000e+00 : f32
      %12 = vector.broadcast %cst_10 : f32 to vector<32x128xf32>
      %c0_11 = arith.constant 0 : index
      %c0_12 = arith.constant 0 : index
      %13 = vector.load %arg7[%c0_11, %c0_12] : memref<32x128xf32, #tpu.memory_space<vmem>>, vector<32x128xf32>
      tpu.vector_store %arg7[%c0_11, %c0_12], %12 {strides = array<i32>} : memref<32x128xf32, #tpu.memory_space<vmem>>, vector<32x128xf32>,
    } else {
    }
    %c0 = arith.constant 0 : index
    %c0_1 = arith.constant 0 : index
    %3 = vector.load %arg7[%c0, %c0_1] : memref<32x128xf32, #tpu.memory_space<vmem>>, vector<32x128xf32>
    %c0_2 = arith.constant 0 : index
    %c0_3 = arith.constant 0 : index
    %4 = vector.load %arg3[%c0_2, %c0_3] : memref<32x128xbf16, #tpu.memory_space<vmem>>, vector<32x128xbf16>
    %c0_4 = arith.constant 0 : index
    %c0_5 = arith.constant 0 : index
    %5 = vector.load %arg4[%c0_4, %c0_5] : memref<128x128xbf16, #tpu.memory_space<vmem>>, vector<128x128xbf16>
    %cst = arith.constant dense<0.000000e+00> : vector<32x128xf32>
    %6 = tpu.matmul %4, %5, %cst {dimension_numbers = #tpu.dot_dimension_numbers<[1], [0], [0], [1], [0, 0, 1, 1], [], []>} : vector<32x128xbf16>, vector<128x128xbf16>, vector<32x128xf32> -> vector<32x128xf32>
    %7 = arith.addf %3, %6 : vector<32x128xf32>
    %c0_6 = arith.constant 0 : index
    %c0_7 = arith.constant 0 : index
    %8 = vector.load %arg7[%c0_6, %c0_7] : memref<32x128xf32, #tpu.memory_space<vmem>>, vector<32x128xf32>
    tpu.vector_store %arg7[%c0_6, %c0_7], %7 {strides = array<i32>} : memref<32x128xf32, #tpu.memory_space<vmem>>, vector<32x128xf32>,
    %c0_i32_8 = arith.constant 0 : i32
    %9 = arith.cmpi eq, %arg2, %c0_i32_8 : i32
    %10 = arith.extui %9 : i1 to i32
    %c0_i32_9 = arith.constant 0 : i32
    %11 = arith.cmpi ne, %10, %c0_i32_9 : i32
    scf.if %11 {
      %c0_10 = arith.constant 0 : index
      %c0_11 = arith.constant 0 : index
      %12 = vector.load %arg7[%c0_10, %c0_11] : memref<32x128xf32, #tpu.memory_space<vmem>>, vector<32x128xf32>
      %c0_12 = arith.constant 0 : index
      %c0_13 = arith.constant 0 : index
      %13 = vector.load %arg5[%c0_12, %c0_13] : memref<1x128xf32, #tpu.memory_space<vmem>>, vector<1x128xf32>
      %14 = vector.broadcast %13 : vector<1x128xf32> to vector<32x128xf32>
      %15 = arith.addf %12, %14 : vector<32x128xf32>
      %c0_14 = arith.constant 0 : index
      %c0_15 = arith.constant 0 : index
      %16 = vector.load %arg6[%c0_14, %c0_15] : memref<32x128xf32, #tpu.memory_space<vmem>>, vector<32x128xf32>
      tpu.vector_store %arg6[%c0_14, %c0_15], %15 {strides = array<i32>} : memref<32x128xf32, #tpu.memory_space<vmem>>, vector<32x128xf32>,
    } else {
    }
    return
  }
  func.func @transform_0(%arg0: i32, %arg1: i32, %arg2: i32) -> (i32, i32) {
    %c0_i32 = arith.constant 0 : i32
    return %arg0, %arg2 : i32, i32
  }
  func.func @transform_1(%arg0: i32, %arg1: i32, %arg2: i32) -> (i32, i32) {
    %c0_i32 = arith.constant 0 : i32
    return %arg2, %arg1 : i32, i32
  }
  func.func @transform_2(%arg0: i32, %arg1: i32, %arg2: i32) -> (i32, i32) {
    %c0_i32 = arith.constant 0 : i32
    %c0_i32_0 = arith.constant 0 : i32
    return %c0_i32, %arg1 : i32, i32
  }
  func.func @transform_3(%arg0: i32, %arg1: i32, %arg2: i32) -> (i32, i32) {
    %c0_i32 = arith.constant 0 : i32
    return %arg0, %arg1 : i32, i32
  }
}

</mosaic_0001>

<llo_original>
// kernel: model_forward.5
$region0: #{model_forward.5}
  #allocation0 [shape = 'u32[]', space=smem, size = 0x4, offset = 0x4, fixed_abs, tag = 'smem constant byte address 0x4 - core index']
  #allocation1 [shape = 'u32[144,128]{1,0:T(1,128)}', space=vmem, size = 0x12000, scoped, tag = 'internal scratch']
  #allocation2 [shape = 'f32[32,128]{1,0:T(8,128)}', space=vmem, size = 0x4000, scoped, tag = 'scratch operand']
  %s0 = inlined_call_operand.vmem [shape: bf16[64,4], index: 0, kind: input, shape index: {}]
  %s1 = inlined_call_operand.vmem [shape: bf16[4,128], index: 1, kind: input, shape index: {}]
  %s2 = inlined_call_operand.vmem [shape: f32[1,128], index: 2, kind: input, shape index: {}]
  %s3 = inlined_call_operand.vmem [shape: bf16[64,128], index: 3, kind: output, shape index: {}]
  %s4 = sld [smem:[#allocation0]]
  $region53: #{model_forward.5} parent=0
    _
  %s6 = ssub.s32 1, %s4
  %s7 = scalar_select 0, %s6, %s4
  loop: start=0, step=1, limit=4
  $region2: #{model_forward.5} parent=0 // loop_pre_header
    _
  $region3: #{model_forward.5} parent=0 // loop_header
    %s9 = sphi 0, %s13
    %p10 = scmp.ge.s32.totalorder %s9, 4
    %s16 = sphi 0, %s35
    %s17 = sphi 0, %s31
    %s18 = sphi 0, %s27
    %s19 = sphi 0, %s16
    %s20 = sphi 0, %s17
    %s21 = sphi 0, %s18
    %s22 = sphi 0, %s19
    %s23 = sphi 0, %s20
    %s24 = sphi 0, %s21
    %s40 = sphi 0, %s42
    %s43 = sphi 0, %s40
    %s44 = sphi 0, %s43
    %s60 = sphi 0, %s44
    %s68 = sphi 0, %s70
    %s71 = sphi 0, %s68
    %s72 = sphi 0, %s71
    %s88 = sphi 0, %s72
    %s94 = sphi 0, %s96
    %s97 = sphi 0, %s94
    %s98 = sphi 0, %s97
    %s114 = sphi 0, %s98
    %s122 = sphi 0, %s124
    %s125 = sphi 0, %s122
    %s126 = sphi 0, %s125
    %s142 = sphi 0, %s126
  $region4: #{model_forward.5} parent=0 // loop_header_branch
    %12 = sbr.rel (%p10) target = $region8
  $region5: #{model_forward.5} parent=0 // loop_body
    %s14 = ssub.s32 %s9, 1
    %s15 = ssub.s32 %s9, 2
    %s25 = sadd.s32 1, %s18
    %p26 = scmp.ge.s32.totalorder %s25, 1
    %s27 = scalar_select %p26, 0, %s25
    %s28 = sadd.s32 1, %s17
    %s29 = scalar_select %p26, %s28, %s17
    %p30 = scmp.ge.s32.totalorder %s29, 1
    %s31 = scalar_select %p30, 0, %s29
    %s32 = sadd.s32 1, %s16
    %s33 = scalar_select %p30, %s32, %s16
    %p34 = scmp.ge.s32.totalorder %s33, 2
    %s35 = scalar_select %p34, 0, %s33
    %s36 = ssub.s32 %s16, %s35
    %s37 = ssub.s32 %s18, %s27
    %s38 = sor.u32 %s36, %s37
    %p39 = scmp.eq.s32.totalorder %s38, 0
    %s41 = sadd.s32 %s40, 1
    %s42 = scalar_select %p39, %s40, %s41
    %p45 = pneg %p39
    %p46 = scmp.eq.s32.totalorder %s9, 1
    %p47 = por %p45, %p46
    %p48 = scmp.ne.s32.totalorder %s40, %s43
    %p49 = scmp.eq.s32.totalorder %s9, 0
    %p50 = por %p48, %p49
    %p51 = scmp.ne.s32.totalorder %s40, %s43
    %p52 = scmp.eq.s32.totalorder %s14, 1
    %p53 = por %p51, %p52
    %p54 = scmp.ne.s32.totalorder %s43, %s44
    %p55 = scmp.eq.s32.totalorder %s14, 0
    %p56 = por %p54, %p55
    %p57 = scmp.ne.s32.totalorder %s43, %s44
    %p58 = scmp.eq.s32.totalorder %s15, 1
    %p59 = por %p57, %p58
    %p61 = scmp.ne.s32.totalorder %s44, %s60
    %p62 = scmp.eq.s32.totalorder %s15, 0
    %p63 = por %p61, %p62
    %s64 = ssub.s32 %s18, %s27
    %s65 = ssub.s32 %s17, %s31
    %s66 = sor.u32 %s64, %s65
    %p67 = scmp.eq.s32.totalorder %s66, 0
    %s69 = sadd.s32 %s68, 1
    %s70 = scalar_select %p67, %s68, %s69
    %p73 = pneg %p67
    %p74 = scmp.eq.s32.totalorder %s9, 1
    %p75 = por %p73, %p74
    %p76 = scmp.ne.s32.totalorder %s68, %s71
    %p77 = scmp.eq.s32.totalorder %s9, 0
    %p78 = por %p76, %p77
    %p79 = scmp.ne.s32.totalorder %s68, %s71
    %p80 = scmp.eq.s32.totalorder %s14, 1
    %p81 = por %p79, %p80
    %p82 = scmp.ne.s32.totalorder %s71, %s72
    %p83 = scmp.eq.s32.totalorder %s14, 0
    %p84 = por %p82, %p83
    %p85 = scmp.ne.s32.totalorder %s71, %s72
    %p86 = scmp.eq.s32.totalorder %s15, 1
    %p87 = por %p85, %p86
    %p89 = scmp.ne.s32.totalorder %s72, %s88
    %p90 = scmp.eq.s32.totalorder %s15, 0
    %p91 = por %p89, %p90
    %s92 = ssub.s32 %s17, %s31
    %p93 = scmp.eq.s32.totalorder %s92, 0
    %s95 = sadd.s32 %s94, 1
    %s96 = scalar_select %p93, %s94, %s95
    %p99 = pneg %p93
    %p100 = scmp.eq.s32.totalorder %s9, 1
    %p101 = por %p99, %p100
    %p102 = scmp.ne.s32.totalorder %s94, %s97
    %p103 = scmp.eq.s32.totalorder %s9, 0
    %p104 = por %p102, %p103
    %p105 = scmp.ne.s32.totalorder %s94, %s97
    %p106 = scmp.eq.s32.totalorder %s14, 1
    %p107 = por %p105, %p106
    %p108 = scmp.ne.s32.totalorder %s97, %s98
    %p109 = scmp.eq.s32.totalorder %s14, 0
    %p110 = por %p108, %p109
    %p111 = scmp.ne.s32.totalorder %s97, %s98
    %p112 = scmp.eq.s32.totalorder %s15, 1
    %p113 = por %p111, %p112
    %p115 = scmp.ne.s32.totalorder %s98, %s114
    %p116 = scmp.eq.s32.totalorder %s15, 0
    %p117 = por %p115, %p116
    %s118 = ssub.s32 %s16, %s35
    %s119 = ssub.s32 %s17, %s31
    %s120 = sor.u32 %s118, %s119
    %p121 = scmp.eq.s32.totalorder %s120, 0
    %s123 = sadd.s32 %s122, 1
    %s124 = scalar_select %p121, %s122, %s123
    %p127 = pneg %p121
    %p128 = scmp.eq.s32.totalorder %s9, 1
    %p129 = por %p127, %p128
    %p130 = scmp.ne.s32.totalorder %s122, %s125
    %p131 = scmp.eq.s32.totalorder %s9, 0
    %p132 = por %p130, %p131
    %p133 = scmp.ne.s32.totalorder %s122, %s125
    %p134 = scmp.eq.s32.totalorder %s14, 1
    %p135 = por %p133, %p134
    %p136 = scmp.ne.s32.totalorder %s125, %s126
    %p137 = scmp.eq.s32.totalorder %s14, 0
    %p138 = por %p136, %p137
    %p139 = scmp.ne.s32.totalorder %s125, %s126
    %p140 = scmp.eq.s32.totalorder %s15, 1
    %p141 = por %p139, %p140
    %p143 = scmp.ne.s32.totalorder %s126, %s142
    %p144 = scmp.eq.s32.totalorder %s15, 0
    %p145 = por %p143, %p144
    %p146 = scmp.le.s32.totalorder 1, %s9
    %p147 = scmp.lt.s32.totalorder %s9, 3
    %p148 = pnand %p146, %p147
    %p149 = pneg %p148
    // Predicated region
    $region9: #{model_forward.5} parent=5 // pred_check
      _
    $region10: #{model_forward.5} parent=5 // pred_check_branch
      %151 = sbr.rel (%p148) target = $region12
    $region11: #{model_forward.5} parent=5 // pred_region
      %s152 = ssub.s32 %s9, 1
      // Predicated region
      $region13: #{model_forward.5} parent=11 // pred_check
        %p153 = pneg %p84
      $region14: #{model_forward.5} parent=11 // pred_check_branch
        %155 = sbr.rel (%p153) target = $region16
      $region15: #{model_forward.5} parent=11 // pred_region
        %p156 = scmp.lt.s32.totalorder %s21, 0
        %s157 = scalar_select %p156, %s21, 0
        %p158 = scmp.lt.s32.totalorder %s20, 0
        %s159 = scalar_select %p158, %s20, 0
        %s160 = sadd.s32 %s159, %s157
        %s161 = smul.addr %s160, 2
        %s162 = scalar_lea.vmem %s1, %s161
      $region16: #{model_forward.5} parent=11 // pred_fallthru
        _
      // Predicated region
      $region17: #{model_forward.5} parent=11 // pred_check
        %p163 = pneg %p110
      $region18: #{model_forward.5} parent=11 // pred_check_branch
        %165 = sbr.rel (%p163) target = $region20
      $region19: #{model_forward.5} parent=11 // pred_region
        %p166 = scmp.lt.s32.totalorder %s20, 0
        %s167 = scalar_select %p166, %s20, 0
        %s168 = scalar_lea.vmem %s2, %s167
      $region20: #{model_forward.5} parent=11 // pred_fallthru
        _
    $region12: #{model_forward.5} parent=5 // pred_fallthru
      _
    %p169 = scmp.lt.s32.totalorder %s9, 2
    // Predicated region
    $region21: #{model_forward.5} parent=5 // pred_check
      %p170 = pneg %p169
    $region22: #{model_forward.5} parent=5 // pred_check_branch
      %172 = sbr.rel (%p170) target = $region24
    $region23: #{model_forward.5} parent=5 // pred_region
      // Predicated region
      $region25: #{model_forward.5} parent=23 // pred_check
        %p173 = pneg %p50
      $region26: #{model_forward.5} parent=23 // pred_check_branch
        %175 = sbr.rel (%p173) target = $region28
      $region27: #{model_forward.5} parent=23 // pred_region
        %s176 = smul.u32 4, %s16
        %p177 = scmp.lt.s32.totalorder %s176, 7
        %s178 = scalar_select %p177, %s176, 7
        %p179 = scmp.lt.s32.totalorder %s18, 0
        %s180 = scalar_select %p179, %s18, 0
        %s181 = sadd.s32 %s180, %s178
        %s182 = smul.addr %s181, 4
        %s183 = scalar_lea.vmem %s0, %s182
        %s184 = smul.u32 4, %s16
      $region28: #{model_forward.5} parent=23 // pred_fallthru
        _
    $region24: #{model_forward.5} parent=5 // pred_fallthru
      _
    %p185 = scmp.le.s32.totalorder 1, %s9
    %p186 = scmp.lt.s32.totalorder %s9, 3
    %p187 = pnand %p185, %p186
    %p188 = pneg %p187
    // Predicated region
    $region29: #{model_forward.5} parent=5 // pred_check
      _
    $region30: #{model_forward.5} parent=5 // pred_check_branch
      %190 = sbr.rel (%p187) target = $region32
    $region31: #{model_forward.5} parent=5 // pred_region
      %s191 = ssub.s32 %s9, 1
      %s192 = smul.u32 4, %s19
      %p193 = scmp.lt.s32.totalorder %s192, 7
      %s194 = scalar_select %p193, %s192, 7
      %p195 = scmp.lt.s32.totalorder %s21, 0
      %s196 = scalar_select %p195, %s21, 0
      %s197 = sadd.s32 %s196, %s194
      %s198 = smul.addr %s197, 4
      %s199 = scalar_lea.vmem %s0, %s198
      %p200 = pneg %p56
      %p201 = pneg %p53
      %p202 = scmp.lt.s32.totalorder %s21, 0
      %s203 = scalar_select %p202, %s21, 0
      %p204 = scmp.lt.s32.totalorder %s20, 0
      %s205 = scalar_select %p204, %s20, 0
      %s206 = sadd.s32 %s205, %s203
      %s207 = smul.addr %s206, 2
      %s208 = scalar_lea.vmem %s1, %s207
      %p209 = pneg %p84
      %p210 = pneg %p81
      %p211 = scmp.lt.s32.totalorder %s20, 0
      %s212 = scalar_select %p211, %s20, 0
      %s213 = scalar_lea.vmem %s2, %s212
      %p214 = pneg %p110
      %p215 = pneg %p107
      %p216 = pneg %p138
      %p217 = pneg %p135
      %s218 = smul.u32 4, %s19
      %p219 = scmp.lt.s32.totalorder %s218, 7
      %s220 = scalar_select %p219, %s218, 7
      %p221 = scmp.lt.s32.totalorder %s20, 0
      %s222 = scalar_select %p221, %s20, 0
      %s223 = sadd.s32 %s222, %s220
      %s224 = smul.addr %s223, 4
      %s225 = scalar_lea.vmem %s3, %s224
      %s226 = smul.u32 4, %s19
      %p227 = scmp.lt.s32.totalorder %s226, 7
      %s228 = scalar_select %p227, %s226, 7
      %p229 = scmp.lt.s32.totalorder %s21, 0
      %s230 = scalar_select %p229, %s21, 0
      %s231 = sadd.s32 %s230, %s228
      %s232 = smul.addr %s231, 4
      %s233 = scalar_lea.vmem %s0, %s232
      %s234 = smul.u32 4, %s19
      %p235 = scmp.lt.s32.totalorder %s21, 0
      %s236 = scalar_select %p235, %s21, 0
      %p237 = scmp.lt.s32.totalorder %s20, 0
      %s238 = scalar_select %p237, %s20, 0
      %s239 = sadd.s32 %s238, %s236
      %s240 = smul.addr %s239, 2
      %s241 = scalar_lea.vmem %s1, %s240
      %p242 = scmp.lt.s32.totalorder %s20, 0
      %s243 = scalar_select %p242, %s20, 0
      %s244 = scalar_lea.vmem %s2, %s243
      %s245 = smul.u32 4, %s19
      %p246 = scmp.lt.s32.totalorder %s245, 7
      %s247 = scalar_select %p246, %s245, 7
      %p248 = scmp.lt.s32.totalorder %s20, 0
      %s249 = scalar_select %p248, %s20, 0
      %s250 = sadd.s32 %s249, %s247
      %s251 = smul.addr %s250, 4
      %s252 = scalar_lea.vmem %s3, %s251
      %s253 = smul.u32 4, %s19
      %p255 = scmp.eq.s32.totalorder %s21, 0
      // Predicated region
      $region33: #{model_forward.5} parent=31 // pred_check
        %p256 = pneg %p255
      $region34: #{model_forward.5} parent=31 // pred_check_branch
        %258 = sbr.rel (%p256) target = $region36
      $region35: #{model_forward.5} parent=31 // pred_region
        %259 = vst [vmem:[#allocation2] sm:$0xff] 0.0
        %260 = vst [vmem:[#allocation2 + $0x8] sm:$0xff] 0.0
        %261 = vst [vmem:[#allocation2 + $0x10] sm:$0xff] 0.0
        %262 = vst [vmem:[#allocation2 + $0x18] sm:$0xff] 0.0
      $region36: #{model_forward.5} parent=31 // pred_fallthru
        _
      %v263 = vld [vmem:[#allocation2] sm:$0xff]
      %v264 = vld [vmem:[#allocation2 + $0x8] sm:$0xff]
      %v265 = vld [vmem:[#allocation2 + $0x10] sm:$0xff]
      %v266 = vld [vmem:[#allocation2 + $0x18] sm:$0xff]
      %v267 = vld [vmem:[%s233] sm:$0xf]
      %v268 = vld [vmem:[%s233 + $0x4] sm:$0xf]
      %v269 = vld [vmem:[%s233 + $0x8] sm:$0xf]
      %v270 = vld [vmem:[%s233 + $0xc] sm:$0xf]
      %v271 = vld [vmem:[%s241] sm:$0x3]
      %v276 = vunpack.c.l.b16 %v267
      %v277 = vunpack.c.l.b16 %v268
      %v278 = vunpack.c.l.b16 %v269
      %v279 = vunpack.c.l.b16 %v270
      %v280 = vpack.c.b16 %v277, %v276
      %v281 = vpack.c.b16 %v279, %v278
      %vm282 = vcmask 31744
      %v284 = vsel %vm282, %v280, 0
      %v287 = vsel %vm282, %v281, 0
      %vm289 = vcmask 1041408
      %v291 = vsel %vm289, %v271, 0
      %293 = vmatprep.subr.bf16.mxu0 0
      %294 = vmatpush1.bf16.msra.mxu0 %v291
      %295 = vmatprep.subr.bf16.mxu0 0
      %296 = vmatpush1.bf16.msra.mxu0 0
      %297 = vmatprep.subr.bf16.mxu0 0
      %298 = vmatpush1.bf16.msra.mxu0 0
      %299 = vmatprep.subr.bf16.mxu0 0
      %300 = vmatpush1.bf16.msra.mxu0 0
      %301 = vmatprep.subr.bf16.mxu0 0
      %302 = vmatpush1.bf16.msra.mxu0 0
      %303 = vmatprep.subr.bf16.mxu0 0
      %304 = vmatpush1.bf16.msra.mxu0 0
      %305 = vmatprep.subr.bf16.mxu0 0
      %306 = vmatpush1.bf16.msra.mxu0 0
      %307 = vmatprep.subr.bf16.mxu0 0
      %308 = vmatpush1.bf16.msra.mxu0 0
      %309 = vmatprep.subr.bf16.mxu0 0
      %310 = vmatpush1.bf16.msra.mxu0 0
      %311 = vmatprep.subr.bf16.mxu0 0
      %312 = vmatpush1.bf16.msra.mxu0 0
      %313 = vmatprep.subr.bf16.mxu0 0
      %314 = vmatpush1.bf16.msra.mxu0 0
      %315 = vmatprep.subr.bf16.mxu0 0
      %316 = vmatpush1.bf16.msra.mxu0 0
      %317 = vmatprep.subr.bf16.mxu0 0
      %318 = vmatpush1.bf16.msra.mxu0 0
      %319 = vmatprep.subr.bf16.mxu0 0
      %320 = vmatpush1.bf16.msra.mxu0 0
      %321 = vmatprep.subr.bf16.mxu0 0
      %322 = vmatpush1.bf16.msra.mxu0 0
      %323 = vmatprep.subr.bf16.mxu0 0
      %324 = vmatpush1.bf16.msra.mxu0 0
      %325 = vmatprep.mubr.bf16.mxu0 0
      %326 = vmatmul.mubr.bf16.gmra.mrb[0].mxu0 %v284
      %v327 = vpop.f32.mrb[0].mxu0
      %v328 = vadd.f32 0.0, %v327
      %v329 = vpop.f32.mrb[0].mxu0
      %v330 = vpop.f32.mrb[0].mxu0
      %v331 = vadd.f32 0.0, %v330
      %v332 = vpop.f32.mrb[0].mxu0
      %333 = vmatprep.mubr.bf16.mxu0 0
      %334 = vmatmul.mubr.bf16.gmra.mrb[0].mxu0 %v287
      %v335 = vpop.f32.mrb[0].mxu0
      %v336 = vadd.f32 0.0, %v335
      %v337 = vpop.f32.mrb[0].mxu0
      %v338 = vpop.f32.mrb[0].mxu0
      %v339 = vadd.f32 0.0, %v338
      %v340 = vpop.f32.mrb[0].mxu0
      %341 = vdwg.mxu0
      %v342 = vadd.f32 %v263, %v328
      %v343 = vadd.f32 %v264, %v331
      %v344 = vadd.f32 %v265, %v336
      %v345 = vadd.f32 %v266, %v339
      %346 = vst [vmem:[#allocation2] sm:$0xff] %v342
      %347 = vst [vmem:[#allocation2 + $0x8] sm:$0xff] %v343
      %348 = vst [vmem:[#allocation2 + $0x10] sm:$0xff] %v344
      %349 = vst [vmem:[#allocation2 + $0x18] sm:$0xff] %v345
      // Predicated region
      $region37: #{model_forward.5} parent=31 // pred_check
        %p350 = pneg %p255
      $region38: #{model_forward.5} parent=31 // pred_check_branch
        %352 = sbr.rel (%p350) target = $region40
      $region39: #{model_forward.5} parent=31 // pred_region
        %v353 = vld [vmem:[#allocation2] sm:$0xff]
        %v354 = vld [vmem:[#allocation2 + $0x8] sm:$0xff]
        %v355 = vld [vmem:[#allocation2 + $0x10] sm:$0xff]
        %v356 = vld [vmem:[#allocation2 + $0x18] sm:$0xff]
        %v357 = vld [vmem:[%s244] sm:$0x1]
        %v359 = vlaneseq
        %v360 = vshrl.u32 %v359, 7
        %v361 = vsub.s32 0, %v360
        %v362 = vrot.slane %v357, %v361
        %v364 = vadd.f32 %v353, %v362
        %v365 = vadd.f32 %v354, %v362
        %v366 = vadd.f32 %v355, %v362
        %v367 = vadd.f32 %v356, %v362
        %v368 = vpack.c.bf16 %v365, %v364
        %v369 = vpack.c.bf16 %v367, %v366
        %v372 = vunpack.c.l.b16 %v368
        %v373 = vunpack.c.h.b16 %v368
        %v374 = vunpack.c.l.b16 %v369
        %v375 = vunpack.c.h.b16 %v369
        %v376 = vpack.c.b16 %v372, %v372
        %v377 = vpack.c.b16 %v373, %v373
        %v378 = vpack.c.b16 %v374, %v374
        %v379 = vpack.c.b16 %v375, %v375
        %384 = vst [vmem:[%s252] sm:$0xf] %v376
        %385 = vst [vmem:[%s252 + $0x4] sm:$0xf] %v377
        %386 = vst [vmem:[%s252 + $0x8] sm:$0xf] %v378
        %387 = vst [vmem:[%s252 + $0xc] sm:$0xf] %v379
      $region40: #{model_forward.5} parent=31 // pred_fallthru
        _
      %s388 = smul.u32 4, %s19
      %p389 = scmp.lt.s32.totalorder %s388, 7
      %s390 = scalar_select %p389, %s388, 7
      %p391 = scmp.lt.s32.totalorder %s20, 0
      %s392 = scalar_select %p391, %s20, 0
      %s393 = sadd.s32 %s392, %s390
      %s394 = smul.addr %s393, 4
      %s395 = scalar_lea.vmem %s3, %s394
      // Predicated region
      $region41: #{model_forward.5} parent=31 // pred_check
        %p396 = pneg %p135
      $region42: #{model_forward.5} parent=31 // pred_check_branch
        %398 = sbr.rel (%p396) target = $region44
      $region43: #{model_forward.5} parent=31 // pred_region
        %s399 = smul.u32 4, %s19
      $region44: #{model_forward.5} parent=31 // pred_fallthru
        _
    $region32: #{model_forward.5} parent=5 // pred_fallthru
      _
    %p400 = scmp.le.s32.totalorder 2, %s9
    // Predicated region
    $region45: #{model_forward.5} parent=5 // pred_check
      %p401 = pneg %p400
    $region46: #{model_forward.5} parent=5 // pred_check_branch
      %403 = sbr.rel (%p401) target = $region48
    $region47: #{model_forward.5} parent=5 // pred_region
      %s404 = ssub.s32 %s9, 2
      // Predicated region
      $region49: #{model_forward.5} parent=47 // pred_check
        %p405 = pneg %p141
      $region50: #{model_forward.5} parent=47 // pred_check_branch
        %407 = sbr.rel (%p405) target = $region52
      $region51: #{model_forward.5} parent=47 // pred_region
        %s408 = smul.u32 4, %s22
        %p409 = scmp.lt.s32.totalorder %s408, 7
        %s410 = scalar_select %p409, %s408, 7
        %p411 = scmp.lt.s32.totalorder %s23, 0
        %s412 = scalar_select %p411, %s23, 0
        %s413 = sadd.s32 %s412, %s410
        %s414 = smul.addr %s413, 4
        %s415 = scalar_lea.vmem %s3, %s414
      $region52: #{model_forward.5} parent=47 // pred_fallthru
        _
    $region48: #{model_forward.5} parent=5 // pred_fallthru
      _
  $region6: #{model_forward.5} parent=0 // loop_footer
    %s13 = sadd.s32 1, %s9
  $region7: #{model_forward.5} parent=0 // loop_footer_branch
    %8 = sbr.rel target = $region3
  $region8: #{model_forward.5} parent=0 // loop_exit
    _

// kernel: model_forward.7
$region0: #{model_forward.7}
  #allocation0 [shape = 'u32[]', space=smem, size = 0x4, offset = 0x4, fixed_abs, tag = 'smem constant byte address 0x4 - core index']
  #allocation1 [shape = 'u32[144,128]{1,0:T(1,128)}', space=vmem, size = 0x12000, scoped, tag = 'internal scratch']
  #allocation2 [shape = 'f32[32,128]{1,0:T(8,128)}', space=vmem, size = 0x4000, scoped, tag = 'scratch operand']
  %s0 = inlined_call_operand.vmem [shape: bf16[64,128], index: 0, kind: input, shape index: {}]
  %s1 = inlined_call_operand.vmem [shape: bf16[128,128], index: 1, kind: input, shape index: {}]
  %s2 = inlined_call_operand.vmem [shape: f32[1,128], index: 2, kind: input, shape index: {}]
  %s3 = inlined_call_operand.vmem [shape: bf16[64,128], index: 3, kind: output, shape index: {}]
  %s4 = sld [smem:[#allocation0]]
  $region53: #{model_forward.7} parent=0
    _
  %s6 = ssub.s32 1, %s4
  %s7 = scalar_select 0, %s6, %s4
  loop: start=0, step=1, limit=4
  $region2: #{model_forward.7} parent=0 // loop_pre_header
    _
  $region3: #{model_forward.7} parent=0 // loop_header
    %s9 = sphi 0, %s13
    %p10 = scmp.ge.s32.totalorder %s9, 4
    %s16 = sphi 0, %s35
    %s17 = sphi 0, %s31
    %s18 = sphi 0, %s27
    %s19 = sphi 0, %s16
    %s20 = sphi 0, %s17
    %s21 = sphi 0, %s18
    %s22 = sphi 0, %s19
    %s23 = sphi 0, %s20
    %s24 = sphi 0, %s21
    %s40 = sphi 0, %s42
    %s43 = sphi 0, %s40
    %s44 = sphi 0, %s43
    %s60 = sphi 0, %s44
    %s68 = sphi 0, %s70
    %s71 = sphi 0, %s68
    %s72 = sphi 0, %s71
    %s88 = sphi 0, %s72
    %s94 = sphi 0, %s96
    %s97 = sphi 0, %s94
    %s98 = sphi 0, %s97
    %s114 = sphi 0, %s98
    %s122 = sphi 0, %s124
    %s125 = sphi 0, %s122
    %s126 = sphi 0, %s125
    %s142 = sphi 0, %s126
  $region4: #{model_forward.7} parent=0 // loop_header_branch
    %12 = sbr.rel (%p10) target = $region8
  $region5: #{model_forward.7} parent=0 // loop_body
    %s14 = ssub.s32 %s9, 1
    %s15 = ssub.s32 %s9, 2
    %s25 = sadd.s32 1, %s18
    %p26 = scmp.ge.s32.totalorder %s25, 1
    %s27 = scalar_select %p26, 0, %s25
    %s28 = sadd.s32 1, %s17
    %s29 = scalar_select %p26, %s28, %s17
    %p30 = scmp.ge.s32.totalorder %s29, 1
    %s31 = scalar_select %p30, 0, %s29
    %s32 = sadd.s32 1, %s16
    %s33 = scalar_select %p30, %s32, %s16
    %p34 = scmp.ge.s32.totalorder %s33, 2
    %s35 = scalar_select %p34, 0, %s33
    %s36 = ssub.s32 %s16, %s35
    %s37 = ssub.s32 %s18, %s27
    %s38 = sor.u32 %s36, %s37
    %p39 = scmp.eq.s32.totalorder %s38, 0
    %s41 = sadd.s32 %s40, 1
    %s42 = scalar_select %p39, %s40, %s41
    %p45 = pneg %p39
    %p46 = scmp.eq.s32.totalorder %s9, 1
    %p47 = por %p45, %p46
    %p48 = scmp.ne.s32.totalorder %s40, %s43
    %p49 = scmp.eq.s32.totalorder %s9, 0
    %p50 = por %p48, %p49
    %p51 = scmp.ne.s32.totalorder %s40, %s43
    %p52 = scmp.eq.s32.totalorder %s14, 1
    %p53 = por %p51, %p52
    %p54 = scmp.ne.s32.totalorder %s43, %s44
    %p55 = scmp.eq.s32.totalorder %s14, 0
    %p56 = por %p54, %p55
    %p57 = scmp.ne.s32.totalorder %s43, %s44
    %p58 = scmp.eq.s32.totalorder %s15, 1
    %p59 = por %p57, %p58
    %p61 = scmp.ne.s32.totalorder %s44, %s60
    %p62 = scmp.eq.s32.totalorder %s15, 0
    %p63 = por %p61, %p62
    %s64 = ssub.s32 %s18, %s27
    %s65 = ssub.s32 %s17, %s31
    %s66 = sor.u32 %s64, %s65
    %p67 = scmp.eq.s32.totalorder %s66, 0
    %s69 = sadd.s32 %s68, 1
    %s70 = scalar_select %p67, %s68, %s69
    %p73 = pneg %p67
    %p74 = scmp.eq.s32.totalorder %s9, 1
    %p75 = por %p73, %p74
    %p76 = scmp.ne.s32.totalorder %s68, %s71
    %p77 = scmp.eq.s32.totalorder %s9, 0
    %p78 = por %p76, %p77
    %p79 = scmp.ne.s32.totalorder %s68, %s71
    %p80 = scmp.eq.s32.totalorder %s14, 1
    %p81 = por %p79, %p80
    %p82 = scmp.ne.s32.totalorder %s71, %s72
    %p83 = scmp.eq.s32.totalorder %s14, 0
    %p84 = por %p82, %p83
    %p85 = scmp.ne.s32.totalorder %s71, %s72
    %p86 = scmp.eq.s32.totalorder %s15, 1
    %p87 = por %p85, %p86
    %p89 = scmp.ne.s32.totalorder %s72, %s88
    %p90 = scmp.eq.s32.totalorder %s15, 0
    %p91 = por %p89, %p90
    %s92 = ssub.s32 %s17, %s31
    %p93 = scmp.eq.s32.totalorder %s92, 0
    %s95 = sadd.s32 %s94, 1
    %s96 = scalar_select %p93, %s94, %s95
    %p99 = pneg %p93
    %p100 = scmp.eq.s32.totalorder %s9, 1
    %p101 = por %p99, %p100
    %p102 = scmp.ne.s32.totalorder %s94, %s97
    %p103 = scmp.eq.s32.totalorder %s9, 0
    %p104 = por %p102, %p103
    %p105 = scmp.ne.s32.totalorder %s94, %s97
    %p106 = scmp.eq.s32.totalorder %s14, 1
    %p107 = por %p105, %p106
    %p108 = scmp.ne.s32.totalorder %s97, %s98
    %p109 = scmp.eq.s32.totalorder %s14, 0
    %p110 = por %p108, %p109
    %p111 = scmp.ne.s32.totalorder %s97, %s98
    %p112 = scmp.eq.s32.totalorder %s15, 1
    %p113 = por %p111, %p112
    %p115 = scmp.ne.s32.totalorder %s98, %s114
    %p116 = scmp.eq.s32.totalorder %s15, 0
    %p117 = por %p115, %p116
    %s118 = ssub.s32 %s16, %s35
    %s119 = ssub.s32 %s17, %s31
    %s120 = sor.u32 %s118, %s119
    %p121 = scmp.eq.s32.totalorder %s120, 0
    %s123 = sadd.s32 %s122, 1
    %s124 = scalar_select %p121, %s122, %s123
    %p127 = pneg %p121
    %p128 = scmp.eq.s32.totalorder %s9, 1
    %p129 = por %p127, %p128
    %p130 = scmp.ne.s32.totalorder %s122, %s125
    %p131 = scmp.eq.s32.totalorder %s9, 0
    %p132 = por %p130, %p131
    %p133 = scmp.ne.s32.totalorder %s122, %s125
    %p134 = scmp.eq.s32.totalorder %s14, 1
    %p135 = por %p133, %p134
    %p136 = scmp.ne.s32.totalorder %s125, %s126
    %p137 = scmp.eq.s32.totalorder %s14, 0
    %p138 = por %p136, %p137
    %p139 = scmp.ne.s32.totalorder %s125, %s126
    %p140 = scmp.eq.s32.totalorder %s15, 1
    %p141 = por %p139, %p140
    %p143 = scmp.ne.s32.totalorder %s126, %s142
    %p144 = scmp.eq.s32.totalorder %s15, 0
    %p145 = por %p143, %p144
    %p146 = scmp.le.s32.totalorder 1, %s9
    %p147 = scmp.lt.s32.totalorder %s9, 3
    %p148 = pnand %p146, %p147
    %p149 = pneg %p148
    // Predicated region
    $region9: #{model_forward.7} parent=5 // pred_check
      _
    $region10: #{model_forward.7} parent=5 // pred_check_branch
      %151 = sbr.rel (%p148) target = $region12
    $region11: #{model_forward.7} parent=5 // pred_region
      %s152 = ssub.s32 %s9, 1
      // Predicated region
      $region13: #{model_forward.7} parent=11 // pred_check
        %p153 = pneg %p84
      $region14: #{model_forward.7} parent=11 // pred_check_branch
        %155 = sbr.rel (%p153) target = $region16
      $region15: #{model_forward.7} parent=11 // pred_region
        %s156 = smul.u32 16, %s21
        %p157 = scmp.lt.s32.totalorder %s156, 15
        %s158 = scalar_select %p157, %s156, 15
        %p159 = scmp.lt.s32.totalorder %s20, 0
        %s160 = scalar_select %p159, %s20, 0
        %s161 = sadd.s32 %s160, %s158
        %s162 = smul.addr %s161, 4
        %s163 = scalar_lea.vmem %s1, %s162
        %s164 = smul.u32 16, %s21
      $region16: #{model_forward.7} parent=11 // pred_fallthru
        _
      // Predicated region
      $region17: #{model_forward.7} parent=11 // pred_check
        %p165 = pneg %p110
      $region18: #{model_forward.7} parent=11 // pred_check_branch
        %167 = sbr.rel (%p165) target = $region20
      $region19: #{model_forward.7} parent=11 // pred_region
        %p168 = scmp.lt.s32.totalorder %s20, 0
        %s169 = scalar_select %p168, %s20, 0
        %s170 = scalar_lea.vmem %s2, %s169
      $region20: #{model_forward.7} parent=11 // pred_fallthru
        _
    $region12: #{model_forward.7} parent=5 // pred_fallthru
      _
    %p171 = scmp.lt.s32.totalorder %s9, 2
    // Predicated region
    $region21: #{model_forward.7} parent=5 // pred_check
      %p172 = pneg %p171
    $region22: #{model_forward.7} parent=5 // pred_check_branch
      %174 = sbr.rel (%p172) target = $region24
    $region23: #{model_forward.7} parent=5 // pred_region
      // Predicated region
      $region25: #{model_forward.7} parent=23 // pred_check
        %p175 = pneg %p50
      $region26: #{model_forward.7} parent=23 // pred_check_branch
        %177 = sbr.rel (%p175) target = $region28
      $region27: #{model_forward.7} parent=23 // pred_region
        %s178 = smul.u32 4, %s16
        %p179 = scmp.lt.s32.totalorder %s178, 7
        %s180 = scalar_select %p179, %s178, 7
        %p181 = scmp.lt.s32.totalorder %s18, 0
        %s182 = scalar_select %p181, %s18, 0
        %s183 = sadd.s32 %s182, %s180
        %s184 = smul.addr %s183, 4
        %s185 = scalar_lea.vmem %s0, %s184
        %s186 = smul.u32 4, %s16
      $region28: #{model_forward.7} parent=23 // pred_fallthru
        _
    $region24: #{model_forward.7} parent=5 // pred_fallthru
      _
    %p187 = scmp.le.s32.totalorder 1, %s9
    %p188 = scmp.lt.s32.totalorder %s9, 3
    %p189 = pnand %p187, %p188
    %p190 = pneg %p189
    // Predicated region
    $region29: #{model_forward.7} parent=5 // pred_check
      _
    $region30: #{model_forward.7} parent=5 // pred_check_branch
      %192 = sbr.rel (%p189) target = $region32
    $region31: #{model_forward.7} parent=5 // pred_region
      %s193 = ssub.s32 %s9, 1
      %s194 = smul.u32 4, %s19
      %p195 = scmp.lt.s32.totalorder %s194, 7
      %s196 = scalar_select %p195, %s194, 7
      %p197 = scmp.lt.s32.totalorder %s21, 0
      %s198 = scalar_select %p197, %s21, 0
      %s199 = sadd.s32 %s198, %s196
      %s200 = smul.addr %s199, 4
      %s201 = scalar_lea.vmem %s0, %s200
      %p202 = pneg %p56
      %p203 = pneg %p53
      %s204 = smul.u32 16, %s21
      %p205 = scmp.lt.s32.totalorder %s204, 15
      %s206 = scalar_select %p205, %s204, 15
      %p207 = scmp.lt.s32.totalorder %s20, 0
      %s208 = scalar_select %p207, %s20, 0
      %s209 = sadd.s32 %s208, %s206
      %s210 = smul.addr %s209, 4
      %s211 = scalar_lea.vmem %s1, %s210
      %p212 = pneg %p84
      %p213 = pneg %p81
      %p214 = scmp.lt.s32.totalorder %s20, 0
      %s215 = scalar_select %p214, %s20, 0
      %s216 = scalar_lea.vmem %s2, %s215
      %p217 = pneg %p110
      %p218 = pneg %p107
      %p219 = pneg %p138
      %p220 = pneg %p135
      %s221 = smul.u32 4, %s19
      %p222 = scmp.lt.s32.totalorder %s221, 7
      %s223 = scalar_select %p222, %s221, 7
      %p224 = scmp.lt.s32.totalorder %s20, 0
      %s225 = scalar_select %p224, %s20, 0
      %s226 = sadd.s32 %s225, %s223
      %s227 = smul.addr %s226, 4
      %s228 = scalar_lea.vmem %s3, %s227
      %s229 = smul.u32 4, %s19
      %p230 = scmp.lt.s32.totalorder %s229, 7
      %s231 = scalar_select %p230, %s229, 7
      %p232 = scmp.lt.s32.totalorder %s21, 0
      %s233 = scalar_select %p232, %s21, 0
      %s234 = sadd.s32 %s233, %s231
      %s235 = smul.addr %s234, 4
      %s236 = scalar_lea.vmem %s0, %s235
      %s237 = smul.u32 4, %s19
      %s238 = smul.u32 16, %s21
      %p239 = scmp.lt.s32.totalorder %s238, 15
      %s240 = scalar_select %p239, %s238, 15
      %p241 = scmp.lt.s32.totalorder %s20, 0
      %s242 = scalar_select %p241, %s20, 0
      %s243 = sadd.s32 %s242, %s240
      %s244 = smul.addr %s243, 4
      %s245 = scalar_lea.vmem %s1, %s244
      %s246 = smul.u32 16, %s21
      %p247 = scmp.lt.s32.totalorder %s20, 0
      %s248 = scalar_select %p247, %s20, 0
      %s249 = scalar_lea.vmem %s2, %s248
      %s250 = smul.u32 4, %s19
      %p251 = scmp.lt.s32.totalorder %s250, 7
      %s252 = scalar_select %p251, %s250, 7
      %p253 = scmp.lt.s32.totalorder %s20, 0
      %s254 = scalar_select %p253, %s20, 0
      %s255 = sadd.s32 %s254, %s252
      %s256 = smul.addr %s255, 4
      %s257 = scalar_lea.vmem %s3, %s256
      %s258 = smul.u32 4, %s19
      %p260 = scmp.eq.s32.totalorder %s21, 0
      // Predicated region
      $region33: #{model_forward.7} parent=31 // pred_check
        %p261 = pneg %p260
      $region34: #{model_forward.7} parent=31 // pred_check_branch
        %263 = sbr.rel (%p261) target = $region36
      $region35: #{model_forward.7} parent=31 // pred_region
        %264 = vst [vmem:[#allocation2] sm:$0xff] 0.0
        %265 = vst [vmem:[#allocation2 + $0x8] sm:$0xff] 0.0
        %266 = vst [vmem:[#allocation2 + $0x10] sm:$0xff] 0.0
        %267 = vst [vmem:[#allocation2 + $0x18] sm:$0xff] 0.0
      $region36: #{model_forward.7} parent=31 // pred_fallthru
        _
      %v268 = vld [vmem:[#allocation2] sm:$0xff]
      %v269 = vld [vmem:[#allocation2 + $0x8] sm:$0xff]
      %v270 = vld [vmem:[#allocation2 + $0x10] sm:$0xff]
      %v271 = vld [vmem:[#allocation2 + $0x18] sm:$0xff]
      %v272 = vld [vmem:[%s236] sm:$0xf]
      %v273 = vld [vmem:[%s236 + $0x4] sm:$0xf]
      %v274 = vld [vmem:[%s236 + $0x8] sm:$0xf]
      %v275 = vld [vmem:[%s236 + $0xc] sm:$0xf]
      %v276 = vld [vmem:[%s245] sm:$0xf]
      %v277 = vld [vmem:[%s245 + $0x4] sm:$0xf]
      %v278 = vld [vmem:[%s245 + $0x8] sm:$0xf]
      %v279 = vld [vmem:[%s245 + $0xc] sm:$0xf]
      %v280 = vld [vmem:[%s245 + $0x10] sm:$0xf]
      %v281 = vld [vmem:[%s245 + $0x14] sm:$0xf]
      %v282 = vld [vmem:[%s245 + $0x18] sm:$0xf]
      %v283 = vld [vmem:[%s245 + $0x1c] sm:$0xf]
      %v284 = vld [vmem:[%s245 + $0x20] sm:$0xf]
      %v285 = vld [vmem:[%s245 + $0x24] sm:$0xf]
      %v286 = vld [vmem:[%s245 + $0x28] sm:$0xf]
      %v287 = vld [vmem:[%s245 + $0x2c] sm:$0xf]
      %v288 = vld [vmem:[%s245 + $0x30] sm:$0xf]
      %v289 = vld [vmem:[%s245 + $0x34] sm:$0xf]
      %v290 = vld [vmem:[%s245 + $0x38] sm:$0xf]
      %v291 = vld [vmem:[%s245 + $0x3c] sm:$0xf]
      %v296 = vunpack.c.l.b16 %v272
      %v297 = vunpack.c.l.b16 %v273
      %v298 = vunpack.c.l.b16 %v274
      %v299 = vunpack.c.l.b16 %v275
      %v300 = vpack.c.b16 %v297, %v296
      %v301 = vpack.c.b16 %v299, %v298
      %v320 = vunpack.c.l.b16 %v276
      %v321 = vunpack.c.l.b16 %v277
      %v322 = vunpack.c.l.b16 %v278
      %v323 = vunpack.c.l.b16 %v279
      %v324 = vunpack.c.l.b16 %v280
      %v325 = vunpack.c.l.b16 %v281
      %v326 = vunpack.c.l.b16 %v282
      %v327 = vunpack.c.l.b16 %v283
      %v328 = vunpack.c.l.b16 %v284
      %v329 = vunpack.c.l.b16 %v285
      %v330 = vunpack.c.l.b16 %v286
      %v331 = vunpack.c.l.b16 %v287
      %v332 = vunpack.c.l.b16 %v288
      %v333 = vunpack.c.l.b16 %v289
      %v334 = vunpack.c.l.b16 %v290
      %v335 = vunpack.c.l.b16 %v291
      %v336 = vpack.c.b16 %v321, %v320
      %v337 = vpack.c.b16 %v323, %v322
      %v338 = vpack.c.b16 %v325, %v324
      %v339 = vpack.c.b16 %v327, %v326
      %v340 = vpack.c.b16 %v329, %v328
      %v341 = vpack.c.b16 %v331, %v330
      %v342 = vpack.c.b16 %v333, %v332
      %v343 = vpack.c.b16 %v335, %v334
      %352 = vmatprep.subr.bf16.mxu0 0
      %353 = vmatpush1.bf16.msra.mxu0 %v336
      %354 = vmatprep.subr.bf16.mxu0 0
      %355 = vmatpush1.bf16.msra.mxu0 %v337
      %356 = vmatprep.subr.bf16.mxu0 0
      %357 = vmatpush1.bf16.msra.mxu0 %v338
      %358 = vmatprep.subr.bf16.mxu0 0
      %359 = vmatpush1.bf16.msra.mxu0 %v339
      %360 = vmatprep.subr.bf16.mxu0 0
      %361 = vmatpush1.bf16.msra.mxu0 %v340
      %362 = vmatprep.subr.bf16.mxu0 0
      %363 = vmatpush1.bf16.msra.mxu0 %v341
      %364 = vmatprep.subr.bf16.mxu0 0
      %365 = vmatpush1.bf16.msra.mxu0 %v342
      %366 = vmatprep.subr.bf16.mxu0 0
      %367 = vmatpush1.bf16.msra.mxu0 %v343
      %368 = vmatprep.subr.bf16.mxu0 0
      %369 = vmatpush1.bf16.msra.mxu0 0
      %370 = vmatprep.subr.bf16.mxu0 0
      %371 = vmatpush1.bf16.msra.mxu0 0
      %372 = vmatprep.subr.bf16.mxu0 0
      %373 = vmatpush1.bf16.msra.mxu0 0
      %374 = vmatprep.subr.bf16.mxu0 0
      %375 = vmatpush1.bf16.msra.mxu0 0
      %376 = vmatprep.subr.bf16.mxu0 0
      %377 = vmatpush1.bf16.msra.mxu0 0
      %378 = vmatprep.subr.bf16.mxu0 0
      %379 = vmatpush1.bf16.msra.mxu0 0
      %380 = vmatprep.subr.bf16.mxu0 0
      %381 = vmatpush1.bf16.msra.mxu0 0
      %382 = vmatprep.subr.bf16.mxu0 0
      %383 = vmatpush1.bf16.msra.mxu0 0
      %384 = vmatprep.mubr.bf16.mxu0 0
      %385 = vmatmul.mubr.bf16.gmra.mrb[0].mxu0 %v300
      %v386 = vpop.f32.mrb[0].mxu0
      %v387 = vadd.f32 0.0, %v386
      %v388 = vpop.f32.mrb[0].mxu0
      %v389 = vpop.f32.mrb[0].mxu0
      %v390 = vadd.f32 0.0, %v389
      %v391 = vpop.f32.mrb[0].mxu0
      %392 = vmatprep.mubr.bf16.mxu0 0
      %393 = vmatmul.mubr.bf16.gmra.mrb[0].mxu0 %v301
      %v394 = vpop.f32.mrb[0].mxu0
      %v395 = vadd.f32 0.0, %v394
      %v396 = vpop.f32.mrb[0].mxu0
      %v397 = vpop.f32.mrb[0].mxu0
      %v398 = vadd.f32 0.0, %v397
      %v399 = vpop.f32.mrb[0].mxu0
      %400 = vdwg.mxu0
      %v401 = vadd.f32 %v268, %v387
      %v402 = vadd.f32 %v269, %v390
      %v403 = vadd.f32 %v270, %v395
      %v404 = vadd.f32 %v271, %v398
      %405 = vst [vmem:[#allocation2] sm:$0xff] %v401
      %406 = vst [vmem:[#allocation2 + $0x8] sm:$0xff] %v402
      %407 = vst [vmem:[#allocation2 + $0x10] sm:$0xff] %v403
      %408 = vst [vmem:[#allocation2 + $0x18] sm:$0xff] %v404
      // Predicated region
      $region37: #{model_forward.7} parent=31 // pred_check
        %p409 = pneg %p260
      $region38: #{model_forward.7} parent=31 // pred_check_branch
        %411 = sbr.rel (%p409) target = $region40
      $region39: #{model_forward.7} parent=31 // pred_region
        %v412 = vld [vmem:[#allocation2] sm:$0xff]
        %v413 = vld [vmem:[#allocation2 + $0x8] sm:$0xff]
        %v414 = vld [vmem:[#allocation2 + $0x10] sm:$0xff]
        %v415 = vld [vmem:[#allocation2 + $0x18] sm:$0xff]
        %v416 = vld [vmem:[%s249] sm:$0x1]
        %v418 = vlaneseq
        %v419 = vshrl.u32 %v418, 7
        %v420 = vsub.s32 0, %v419
        %v421 = vrot.slane %v416, %v420
        %v423 = vadd.f32 %v412, %v421
        %v424 = vadd.f32 %v413, %v421
        %v425 = vadd.f32 %v414, %v421
        %v426 = vadd.f32 %v415, %v421
        %v427 = vpack.c.bf16 %v424, %v423
        %v428 = vpack.c.bf16 %v426, %v425
        %v431 = vunpack.c.l.b16 %v427
        %v432 = vunpack.c.h.b16 %v427
        %v433 = vunpack.c.l.b16 %v428
        %v434 = vunpack.c.h.b16 %v428
        %v435 = vpack.c.b16 %v431, %v431
        %v436 = vpack.c.b16 %v432, %v432
        %v437 = vpack.c.b16 %v433, %v433
        %v438 = vpack.c.b16 %v434, %v434
        %443 = vst [vmem:[%s257] sm:$0xf] %v435
        %444 = vst [vmem:[%s257 + $0x4] sm:$0xf] %v436
        %445 = vst [vmem:[%s257 + $0x8] sm:$0xf] %v437
        %446 = vst [vmem:[%s257 + $0xc] sm:$0xf] %v438
      $region40: #{model_forward.7} parent=31 // pred_fallthru
        _
      %s447 = smul.u32 4, %s19
      %p448 = scmp.lt.s32.totalorder %s447, 7
      %s449 = scalar_select %p448, %s447, 7
      %p450 = scmp.lt.s32.totalorder %s20, 0
      %s451 = scalar_select %p450, %s20, 0
      %s452 = sadd.s32 %s451, %s449
      %s453 = smul.addr %s452, 4
      %s454 = scalar_lea.vmem %s3, %s453
      // Predicated region
      $region41: #{model_forward.7} parent=31 // pred_check
        %p455 = pneg %p135
      $region42: #{model_forward.7} parent=31 // pred_check_branch
        %457 = sbr.rel (%p455) target = $region44
      $region43: #{model_forward.7} parent=31 // pred_region
        %s458 = smul.u32 4, %s19
      $region44: #{model_forward.7} parent=31 // pred_fallthru
        _
    $region32: #{model_forward.7} parent=5 // pred_fallthru
      _
    %p459 = scmp.le.s32.totalorder 2, %s9
    // Predicated region
    $region45: #{model_forward.7} parent=5 // pred_check
      %p460 = pneg %p459
    $region46: #{model_forward.7} parent=5 // pred_check_branch
      %462 = sbr.rel (%p460) target = $region48
    $region47: #{model_forward.7} parent=5 // pred_region
      %s463 = ssub.s32 %s9, 2
      // Predicated region
      $region49: #{model_forward.7} parent=47 // pred_check
        %p464 = pneg %p141
      $region50: #{model_forward.7} parent=47 // pred_check_branch
        %466 = sbr.rel (%p464) target = $region52
      $region51: #{model_forward.7} parent=47 // pred_region
        %s467 = smul.u32 4, %s22
        %p468 = scmp.lt.s32.totalorder %s467, 7
        %s469 = scalar_select %p468, %s467, 7
        %p470 = scmp.lt.s32.totalorder %s23, 0
        %s471 = scalar_select %p470, %s23, 0
        %s472 = sadd.s32 %s471, %s469
        %s473 = smul.addr %s472, 4
        %s474 = scalar_lea.vmem %s3, %s473
      $region52: #{model_forward.7} parent=47 // pred_fallthru
        _
    $region48: #{model_forward.7} parent=5 // pred_fallthru
      _
  $region6: #{model_forward.7} parent=0 // loop_footer
    %s13 = sadd.s32 1, %s9
  $region7: #{model_forward.7} parent=0 // loop_footer_branch
    %8 = sbr.rel target = $region3
  $region8: #{model_forward.7} parent=0 // loop_exit
    _

// kernel: model_forward.9
$region0: #{model_forward.9}
  #allocation0 [shape = 'u32[]', space=smem, size = 0x4, offset = 0x4, fixed_abs, tag = 'smem constant byte address 0x4 - core index']
  #allocation1 [shape = 'u32[144,128]{1,0:T(1,128)}', space=vmem, size = 0x12000, scoped, tag = 'internal scratch']
  #allocation2 [shape = 'f32[32,128]{1,0:T(8,128)}', space=vmem, size = 0x4000, scoped, tag = 'scratch operand']
  %s0 = inlined_call_operand.vmem [shape: bf16[64,128], index: 0, kind: input, shape index: {}]
  %s1 = inlined_call_operand.vmem [shape: bf16[128,128], index: 1, kind: input, shape index: {}]
  %s2 = inlined_call_operand.vmem [shape: f32[1,128], index: 2, kind: input, shape index: {}]
  %s3 = inlined_call_operand.vmem [shape: f32[64,128], index: 3, kind: output, shape index: {}]
  %s4 = sld [smem:[#allocation0]]
  $region53: #{model_forward.9} parent=0
    _
  %s6 = ssub.s32 1, %s4
  %s7 = scalar_select 0, %s6, %s4
  loop: start=0, step=1, limit=4
  $region2: #{model_forward.9} parent=0 // loop_pre_header
    _
  $region3: #{model_forward.9} parent=0 // loop_header
    %s9 = sphi 0, %s13
    %p10 = scmp.ge.s32.totalorder %s9, 4
    %s16 = sphi 0, %s35
    %s17 = sphi 0, %s31
    %s18 = sphi 0, %s27
    %s19 = sphi 0, %s16
    %s20 = sphi 0, %s17
    %s21 = sphi 0, %s18
    %s22 = sphi 0, %s19
    %s23 = sphi 0, %s20
    %s24 = sphi 0, %s21
    %s40 = sphi 0, %s42
    %s43 = sphi 0, %s40
    %s44 = sphi 0, %s43
    %s60 = sphi 0, %s44
    %s68 = sphi 0, %s70
    %s71 = sphi 0, %s68
    %s72 = sphi 0, %s71
    %s88 = sphi 0, %s72
    %s94 = sphi 0, %s96
    %s97 = sphi 0, %s94
    %s98 = sphi 0, %s97
    %s114 = sphi 0, %s98
    %s122 = sphi 0, %s124
    %s125 = sphi 0, %s122
    %s126 = sphi 0, %s125
    %s142 = sphi 0, %s126
  $region4: #{model_forward.9} parent=0 // loop_header_branch
    %12 = sbr.rel (%p10) target = $region8
  $region5: #{model_forward.9} parent=0 // loop_body
    %s14 = ssub.s32 %s9, 1
    %s15 = ssub.s32 %s9, 2
    %s25 = sadd.s32 1, %s18
    %p26 = scmp.ge.s32.totalorder %s25, 1
    %s27 = scalar_select %p26, 0, %s25
    %s28 = sadd.s32 1, %s17
    %s29 = scalar_select %p26, %s28, %s17
    %p30 = scmp.ge.s32.totalorder %s29, 1
    %s31 = scalar_select %p30, 0, %s29
    %s32 = sadd.s32 1, %s16
    %s33 = scalar_select %p30, %s32, %s16
    %p34 = scmp.ge.s32.totalorder %s33, 2
    %s35 = scalar_select %p34, 0, %s33
    %s36 = ssub.s32 %s16, %s35
    %s37 = ssub.s32 %s18, %s27
    %s38 = sor.u32 %s36, %s37
    %p39 = scmp.eq.s32.totalorder %s38, 0
    %s41 = sadd.s32 %s40, 1
    %s42 = scalar_select %p39, %s40, %s41
    %p45 = pneg %p39
    %p46 = scmp.eq.s32.totalorder %s9, 1
    %p47 = por %p45, %p46
    %p48 = scmp.ne.s32.totalorder %s40, %s43
    %p49 = scmp.eq.s32.totalorder %s9, 0
    %p50 = por %p48, %p49
    %p51 = scmp.ne.s32.totalorder %s40, %s43
    %p52 = scmp.eq.s32.totalorder %s14, 1
    %p53 = por %p51, %p52
    %p54 = scmp.ne.s32.totalorder %s43, %s44
    %p55 = scmp.eq.s32.totalorder %s14, 0
    %p56 = por %p54, %p55
    %p57 = scmp.ne.s32.totalorder %s43, %s44
    %p58 = scmp.eq.s32.totalorder %s15, 1
    %p59 = por %p57, %p58
    %p61 = scmp.ne.s32.totalorder %s44, %s60
    %p62 = scmp.eq.s32.totalorder %s15, 0
    %p63 = por %p61, %p62
    %s64 = ssub.s32 %s18, %s27
    %s65 = ssub.s32 %s17, %s31
    %s66 = sor.u32 %s64, %s65
    %p67 = scmp.eq.s32.totalorder %s66, 0
    %s69 = sadd.s32 %s68, 1
    %s70 = scalar_select %p67, %s68, %s69
    %p73 = pneg %p67
    %p74 = scmp.eq.s32.totalorder %s9, 1
    %p75 = por %p73, %p74
    %p76 = scmp.ne.s32.totalorder %s68, %s71
    %p77 = scmp.eq.s32.totalorder %s9, 0
    %p78 = por %p76, %p77
    %p79 = scmp.ne.s32.totalorder %s68, %s71
    %p80 = scmp.eq.s32.totalorder %s14, 1
    %p81 = por %p79, %p80
    %p82 = scmp.ne.s32.totalorder %s71, %s72
    %p83 = scmp.eq.s32.totalorder %s14, 0
    %p84 = por %p82, %p83
    %p85 = scmp.ne.s32.totalorder %s71, %s72
    %p86 = scmp.eq.s32.totalorder %s15, 1
    %p87 = por %p85, %p86
    %p89 = scmp.ne.s32.totalorder %s72, %s88
    %p90 = scmp.eq.s32.totalorder %s15, 0
    %p91 = por %p89, %p90
    %s92 = ssub.s32 %s17, %s31
    %p93 = scmp.eq.s32.totalorder %s92, 0
    %s95 = sadd.s32 %s94, 1
    %s96 = scalar_select %p93, %s94, %s95
    %p99 = pneg %p93
    %p100 = scmp.eq.s32.totalorder %s9, 1
    %p101 = por %p99, %p100
    %p102 = scmp.ne.s32.totalorder %s94, %s97
    %p103 = scmp.eq.s32.totalorder %s9, 0
    %p104 = por %p102, %p103
    %p105 = scmp.ne.s32.totalorder %s94, %s97
    %p106 = scmp.eq.s32.totalorder %s14, 1
    %p107 = por %p105, %p106
    %p108 = scmp.ne.s32.totalorder %s97, %s98
    %p109 = scmp.eq.s32.totalorder %s14, 0
    %p110 = por %p108, %p109
    %p111 = scmp.ne.s32.totalorder %s97, %s98
    %p112 = scmp.eq.s32.totalorder %s15, 1
    %p113 = por %p111, %p112
    %p115 = scmp.ne.s32.totalorder %s98, %s114
    %p116 = scmp.eq.s32.totalorder %s15, 0
    %p117 = por %p115, %p116
    %s118 = ssub.s32 %s16, %s35
    %s119 = ssub.s32 %s17, %s31
    %s120 = sor.u32 %s118, %s119
    %p121 = scmp.eq.s32.totalorder %s120, 0
    %s123 = sadd.s32 %s122, 1
    %s124 = scalar_select %p121, %s122, %s123
    %p127 = pneg %p121
    %p128 = scmp.eq.s32.totalorder %s9, 1
    %p129 = por %p127, %p128
    %p130 = scmp.ne.s32.totalorder %s122, %s125
    %p131 = scmp.eq.s32.totalorder %s9, 0
    %p132 = por %p130, %p131
    %p133 = scmp.ne.s32.totalorder %s122, %s125
    %p134 = scmp.eq.s32.totalorder %s14, 1
    %p135 = por %p133, %p134
    %p136 = scmp.ne.s32.totalorder %s125, %s126
    %p137 = scmp.eq.s32.totalorder %s14, 0
    %p138 = por %p136, %p137
    %p139 = scmp.ne.s32.totalorder %s125, %s126
    %p140 = scmp.eq.s32.totalorder %s15, 1
    %p141 = por %p139, %p140
    %p143 = scmp.ne.s32.totalorder %s126, %s142
    %p144 = scmp.eq.s32.totalorder %s15, 0
    %p145 = por %p143, %p144
    %p146 = scmp.le.s32.totalorder 1, %s9
    %p147 = scmp.lt.s32.totalorder %s9, 3
    %p148 = pnand %p146, %p147
    %p149 = pneg %p148
    // Predicated region
    $region9: #{model_forward.9} parent=5 // pred_check
      _
    $region10: #{model_forward.9} parent=5 // pred_check_branch
      %151 = sbr.rel (%p148) target = $region12
    $region11: #{model_forward.9} parent=5 // pred_region
      %s152 = ssub.s32 %s9, 1
      // Predicated region
      $region13: #{model_forward.9} parent=11 // pred_check
        %p153 = pneg %p84
      $region14: #{model_forward.9} parent=11 // pred_check_branch
        %155 = sbr.rel (%p153) target = $region16
      $region15: #{model_forward.9} parent=11 // pred_region
        %s156 = smul.u32 16, %s21
        %p157 = scmp.lt.s32.totalorder %s156, 15
        %s158 = scalar_select %p157, %s156, 15
        %p159 = scmp.lt.s32.totalorder %s20, 0
        %s160 = scalar_select %p159, %s20, 0
        %s161 = sadd.s32 %s160, %s158
        %s162 = smul.addr %s161, 4
        %s163 = scalar_lea.vmem %s1, %s162
        %s164 = smul.u32 16, %s21
      $region16: #{model_forward.9} parent=11 // pred_fallthru
        _
      // Predicated region
      $region17: #{model_forward.9} parent=11 // pred_check
        %p165 = pneg %p110
      $region18: #{model_forward.9} parent=11 // pred_check_branch
        %167 = sbr.rel (%p165) target = $region20
      $region19: #{model_forward.9} parent=11 // pred_region
        %p168 = scmp.lt.s32.totalorder %s20, 0
        %s169 = scalar_select %p168, %s20, 0
        %s170 = scalar_lea.vmem %s2, %s169
      $region20: #{model_forward.9} parent=11 // pred_fallthru
        _
    $region12: #{model_forward.9} parent=5 // pred_fallthru
      _
    %p171 = scmp.lt.s32.totalorder %s9, 2
    // Predicated region
    $region21: #{model_forward.9} parent=5 // pred_check
      %p172 = pneg %p171
    $region22: #{model_forward.9} parent=5 // pred_check_branch
      %174 = sbr.rel (%p172) target = $region24
    $region23: #{model_forward.9} parent=5 // pred_region
      // Predicated region
      $region25: #{model_forward.9} parent=23 // pred_check
        %p175 = pneg %p50
      $region26: #{model_forward.9} parent=23 // pred_check_branch
        %177 = sbr.rel (%p175) target = $region28
      $region27: #{model_forward.9} parent=23 // pred_region
        %s178 = smul.u32 4, %s16
        %p179 = scmp.lt.s32.totalorder %s178, 7
        %s180 = scalar_select %p179, %s178, 7
        %p181 = scmp.lt.s32.totalorder %s18, 0
        %s182 = scalar_select %p181, %s18, 0
        %s183 = sadd.s32 %s182, %s180
        %s184 = smul.addr %s183, 4
        %s185 = scalar_lea.vmem %s0, %s184
        %s186 = smul.u32 4, %s16
      $region28: #{model_forward.9} parent=23 // pred_fallthru
        _
    $region24: #{model_forward.9} parent=5 // pred_fallthru
      _
    %p187 = scmp.le.s32.totalorder 1, %s9
    %p188 = scmp.lt.s32.totalorder %s9, 3
    %p189 = pnand %p187, %p188
    %p190 = pneg %p189
    // Predicated region
    $region29: #{model_forward.9} parent=5 // pred_check
      _
    $region30: #{model_forward.9} parent=5 // pred_check_branch
      %192 = sbr.rel (%p189) target = $region32
    $region31: #{model_forward.9} parent=5 // pred_region
      %s193 = ssub.s32 %s9, 1
      %s194 = smul.u32 4, %s19
      %p195 = scmp.lt.s32.totalorder %s194, 7
      %s196 = scalar_select %p195, %s194, 7
      %p197 = scmp.lt.s32.totalorder %s21, 0
      %s198 = scalar_select %p197, %s21, 0
      %s199 = sadd.s32 %s198, %s196
      %s200 = smul.addr %s199, 4
      %s201 = scalar_lea.vmem %s0, %s200
      %p202 = pneg %p56
      %p203 = pneg %p53
      %s204 = smul.u32 16, %s21
      %p205 = scmp.lt.s32.totalorder %s204, 15
      %s206 = scalar_select %p205, %s204, 15
      %p207 = scmp.lt.s32.totalorder %s20, 0
      %s208 = scalar_select %p207, %s20, 0
      %s209 = sadd.s32 %s208, %s206
      %s210 = smul.addr %s209, 4
      %s211 = scalar_lea.vmem %s1, %s210
      %p212 = pneg %p84
      %p213 = pneg %p81
      %p214 = scmp.lt.s32.totalorder %s20, 0
      %s215 = scalar_select %p214, %s20, 0
      %s216 = scalar_lea.vmem %s2, %s215
      %p217 = pneg %p110
      %p218 = pneg %p107
      %p219 = pneg %p138
      %p220 = pneg %p135
      %s221 = smul.u32 4, %s19
      %p222 = scmp.lt.s32.totalorder %s221, 7
      %s223 = scalar_select %p222, %s221, 7
      %p224 = scmp.lt.s32.totalorder %s20, 0
      %s225 = scalar_select %p224, %s20, 0
      %s226 = sadd.s32 %s225, %s223
      %s227 = smul.addr %s226, 8
      %s228 = scalar_lea.vmem %s3, %s227
      %s229 = smul.u32 4, %s19
      %p230 = scmp.lt.s32.totalorder %s229, 7
      %s231 = scalar_select %p230, %s229, 7
      %p232 = scmp.lt.s32.totalorder %s21, 0
      %s233 = scalar_select %p232, %s21, 0
      %s234 = sadd.s32 %s233, %s231
      %s235 = smul.addr %s234, 4
      %s236 = scalar_lea.vmem %s0, %s235
      %s237 = smul.u32 4, %s19
      %s238 = smul.u32 16, %s21
      %p239 = scmp.lt.s32.totalorder %s238, 15
      %s240 = scalar_select %p239, %s238, 15
      %p241 = scmp.lt.s32.totalorder %s20, 0
      %s242 = scalar_select %p241, %s20, 0
      %s243 = sadd.s32 %s242, %s240
      %s244 = smul.addr %s243, 4
      %s245 = scalar_lea.vmem %s1, %s244
      %s246 = smul.u32 16, %s21
      %p247 = scmp.lt.s32.totalorder %s20, 0
      %s248 = scalar_select %p247, %s20, 0
      %s249 = scalar_lea.vmem %s2, %s248
      %s250 = smul.u32 4, %s19
      %p251 = scmp.lt.s32.totalorder %s250, 7
      %s252 = scalar_select %p251, %s250, 7
      %p253 = scmp.lt.s32.totalorder %s20, 0
      %s254 = scalar_select %p253, %s20, 0
      %s255 = sadd.s32 %s254, %s252
      %s256 = smul.addr %s255, 8
      %s257 = scalar_lea.vmem %s3, %s256
      %s258 = smul.u32 4, %s19
      %p260 = scmp.eq.s32.totalorder %s21, 0
      // Predicated region
      $region33: #{model_forward.9} parent=31 // pred_check
        %p261 = pneg %p260
      $region34: #{model_forward.9} parent=31 // pred_check_branch
        %263 = sbr.rel (%p261) target = $region36
      $region35: #{model_forward.9} parent=31 // pred_region
        %264 = vst [vmem:[#allocation2] sm:$0xff] 0.0
        %265 = vst [vmem:[#allocation2 + $0x8] sm:$0xff] 0.0
        %266 = vst [vmem:[#allocation2 + $0x10] sm:$0xff] 0.0
        %267 = vst [vmem:[#allocation2 + $0x18] sm:$0xff] 0.0
      $region36: #{model_forward.9} parent=31 // pred_fallthru
        _
      %v268 = vld [vmem:[#allocation2] sm:$0xff]
      %v269 = vld [vmem:[#allocation2 + $0x8] sm:$0xff]
      %v270 = vld [vmem:[#allocation2 + $0x10] sm:$0xff]
      %v271 = vld [vmem:[#allocation2 + $0x18] sm:$0xff]
      %v272 = vld [vmem:[%s236] sm:$0xf]
      %v273 = vld [vmem:[%s236 + $0x4] sm:$0xf]
      %v274 = vld [vmem:[%s236 + $0x8] sm:$0xf]
      %v275 = vld [vmem:[%s236 + $0xc] sm:$0xf]
      %v276 = vld [vmem:[%s245] sm:$0xf]
      %v277 = vld [vmem:[%s245 + $0x4] sm:$0xf]
      %v278 = vld [vmem:[%s245 + $0x8] sm:$0xf]
      %v279 = vld [vmem:[%s245 + $0xc] sm:$0xf]
      %v280 = vld [vmem:[%s245 + $0x10] sm:$0xf]
      %v281 = vld [vmem:[%s245 + $0x14] sm:$0xf]
      %v282 = vld [vmem:[%s245 + $0x18] sm:$0xf]
      %v283 = vld [vmem:[%s245 + $0x1c] sm:$0xf]
      %v284 = vld [vmem:[%s245 + $0x20] sm:$0xf]
      %v285 = vld [vmem:[%s245 + $0x24] sm:$0xf]
      %v286 = vld [vmem:[%s245 + $0x28] sm:$0xf]
      %v287 = vld [vmem:[%s245 + $0x2c] sm:$0xf]
      %v288 = vld [vmem:[%s245 + $0x30] sm:$0xf]
      %v289 = vld [vmem:[%s245 + $0x34] sm:$0xf]
      %v290 = vld [vmem:[%s245 + $0x38] sm:$0xf]
      %v291 = vld [vmem:[%s245 + $0x3c] sm:$0xf]
      %v296 = vunpack.c.l.b16 %v272
      %v297 = vunpack.c.l.b16 %v273
      %v298 = vunpack.c.l.b16 %v274
      %v299 = vunpack.c.l.b16 %v275
      %v300 = vpack.c.b16 %v297, %v296
      %v301 = vpack.c.b16 %v299, %v298
      %v320 = vunpack.c.l.b16 %v276
      %v321 = vunpack.c.l.b16 %v277
      %v322 = vunpack.c.l.b16 %v278
      %v323 = vunpack.c.l.b16 %v279
      %v324 = vunpack.c.l.b16 %v280
      %v325 = vunpack.c.l.b16 %v281
      %v326 = vunpack.c.l.b16 %v282
      %v327 = vunpack.c.l.b16 %v283
      %v328 = vunpack.c.l.b16 %v284
      %v329 = vunpack.c.l.b16 %v285
      %v330 = vunpack.c.l.b16 %v286
      %v331 = vunpack.c.l.b16 %v287
      %v332 = vunpack.c.l.b16 %v288
      %v333 = vunpack.c.l.b16 %v289
      %v334 = vunpack.c.l.b16 %v290
      %v335 = vunpack.c.l.b16 %v291
      %v336 = vpack.c.b16 %v321, %v320
      %v337 = vpack.c.b16 %v323, %v322
      %v338 = vpack.c.b16 %v325, %v324
      %v339 = vpack.c.b16 %v327, %v326
      %v340 = vpack.c.b16 %v329, %v328
      %v341 = vpack.c.b16 %v331, %v330
      %v342 = vpack.c.b16 %v333, %v332
      %v343 = vpack.c.b16 %v335, %v334
      %352 = vmatprep.subr.bf16.mxu0 0
      %353 = vmatpush1.bf16.msra.mxu0 %v336
      %354 = vmatprep.subr.bf16.mxu0 0
      %355 = vmatpush1.bf16.msra.mxu0 %v337
      %356 = vmatprep.subr.bf16.mxu0 0
      %357 = vmatpush1.bf16.msra.mxu0 %v338
      %358 = vmatprep.subr.bf16.mxu0 0
      %359 = vmatpush1.bf16.msra.mxu0 %v339
      %360 = vmatprep.subr.bf16.mxu0 0
      %361 = vmatpush1.bf16.msra.mxu0 %v340
      %362 = vmatprep.subr.bf16.mxu0 0
      %363 = vmatpush1.bf16.msra.mxu0 %v341
      %364 = vmatprep.subr.bf16.mxu0 0
      %365 = vmatpush1.bf16.msra.mxu0 %v342
      %366 = vmatprep.subr.bf16.mxu0 0
      %367 = vmatpush1.bf16.msra.mxu0 %v343
      %368 = vmatprep.subr.bf16.mxu0 0
      %369 = vmatpush1.bf16.msra.mxu0 0
      %370 = vmatprep.subr.bf16.mxu0 0
      %371 = vmatpush1.bf16.msra.mxu0 0
      %372 = vmatprep.subr.bf16.mxu0 0
      %373 = vmatpush1.bf16.msra.mxu0 0
      %374 = vmatprep.subr.bf16.mxu0 0
      %375 = vmatpush1.bf16.msra.mxu0 0
      %376 = vmatprep.subr.bf16.mxu0 0
      %377 = vmatpush1.bf16.msra.mxu0 0
      %378 = vmatprep.subr.bf16.mxu0 0
      %379 = vmatpush1.bf16.msra.mxu0 0
      %380 = vmatprep.subr.bf16.mxu0 0
      %381 = vmatpush1.bf16.msra.mxu0 0
      %382 = vmatprep.subr.bf16.mxu0 0
      %383 = vmatpush1.bf16.msra.mxu0 0
      %384 = vmatprep.mubr.bf16.mxu0 0
      %385 = vmatmul.mubr.bf16.gmra.mrb[0].mxu0 %v300
      %v386 = vpop.f32.mrb[0].mxu0
      %v387 = vadd.f32 0.0, %v386
      %v388 = vpop.f32.mrb[0].mxu0
      %v389 = vpop.f32.mrb[0].mxu0
      %v390 = vadd.f32 0.0, %v389
      %v391 = vpop.f32.mrb[0].mxu0
      %392 = vmatprep.mubr.bf16.mxu0 0
      %393 = vmatmul.mubr.bf16.gmra.mrb[0].mxu0 %v301
      %v394 = vpop.f32.mrb[0].mxu0
      %v395 = vadd.f32 0.0, %v394
      %v396 = vpop.f32.mrb[0].mxu0
      %v397 = vpop.f32.mrb[0].mxu0
      %v398 = vadd.f32 0.0, %v397
      %v399 = vpop.f32.mrb[0].mxu0
      %400 = vdwg.mxu0
      %v401 = vadd.f32 %v268, %v387
      %v402 = vadd.f32 %v269, %v390
      %v403 = vadd.f32 %v270, %v395
      %v404 = vadd.f32 %v271, %v398
      %405 = vst [vmem:[#allocation2] sm:$0xff] %v401
      %406 = vst [vmem:[#allocation2 + $0x8] sm:$0xff] %v402
      %407 = vst [vmem:[#allocation2 + $0x10] sm:$0xff] %v403
      %408 = vst [vmem:[#allocation2 + $0x18] sm:$0xff] %v404
      // Predicated region
      $region37: #{model_forward.9} parent=31 // pred_check
        %p409 = pneg %p260
      $region38: #{model_forward.9} parent=31 // pred_check_branch
        %411 = sbr.rel (%p409) target = $region40
      $region39: #{model_forward.9} parent=31 // pred_region
        %v412 = vld [vmem:[#allocation2] sm:$0xff]
        %v413 = vld [vmem:[#allocation2 + $0x8] sm:$0xff]
        %v414 = vld [vmem:[#allocation2 + $0x10] sm:$0xff]
        %v415 = vld [vmem:[#allocation2 + $0x18] sm:$0xff]
        %v416 = vld [vmem:[%s249] sm:$0x1]
        %v418 = vlaneseq
        %v419 = vshrl.u32 %v418, 7
        %v420 = vsub.s32 0, %v419
        %v421 = vrot.slane %v416, %v420
        %v423 = vadd.f32 %v412, %v421
        %v424 = vadd.f32 %v413, %v421
        %v425 = vadd.f32 %v414, %v421
        %v426 = vadd.f32 %v415, %v421
        %427 = vst [vmem:[%s257] sm:$0xff] %v423
        %428 = vst [vmem:[%s257 + $0x8] sm:$0xff] %v424
        %429 = vst [vmem:[%s257 + $0x10] sm:$0xff] %v425
        %430 = vst [vmem:[%s257 + $0x18] sm:$0xff] %v426
      $region40: #{model_forward.9} parent=31 // pred_fallthru
        _
      %s431 = smul.u32 4, %s19
      %p432 = scmp.lt.s32.totalorder %s431, 7
      %s433 = scalar_select %p432, %s431, 7
      %p434 = scmp.lt.s32.totalorder %s20, 0
      %s435 = scalar_select %p434, %s20, 0
      %s436 = sadd.s32 %s435, %s433
      %s437 = smul.addr %s436, 8
      %s438 = scalar_lea.vmem %s3, %s437
      // Predicated region
      $region41: #{model_forward.9} parent=31 // pred_check
        %p439 = pneg %p135
      $region42: #{model_forward.9} parent=31 // pred_check_branch
        %441 = sbr.rel (%p439) target = $region44
      $region43: #{model_forward.9} parent=31 // pred_region
        %s442 = smul.u32 4, %s19
      $region44: #{model_forward.9} parent=31 // pred_fallthru
        _
    $region32: #{model_forward.9} parent=5 // pred_fallthru
      _
    %p443 = scmp.le.s32.totalorder 2, %s9
    // Predicated region
    $region45: #{model_forward.9} parent=5 // pred_check
      %p444 = pneg %p443
    $region46: #{model_forward.9} parent=5 // pred_check_branch
      %446 = sbr.rel (%p444) target = $region48
    $region47: #{model_forward.9} parent=5 // pred_region
      %s447 = ssub.s32 %s9, 2
      // Predicated region
      $region49: #{model_forward.9} parent=47 // pred_check
        %p448 = pneg %p141
      $region50: #{model_forward.9} parent=47 // pred_check_branch
        %450 = sbr.rel (%p448) target = $region52
      $region51: #{model_forward.9} parent=47 // pred_region
        %s451 = smul.u32 4, %s22
        %p452 = scmp.lt.s32.totalorder %s451, 7
        %s453 = scalar_select %p452, %s451, 7
        %p454 = scmp.lt.s32.totalorder %s23, 0
        %s455 = scalar_select %p454, %s23, 0
        %s456 = sadd.s32 %s455, %s453
        %s457 = smul.addr %s456, 8
        %s458 = scalar_lea.vmem %s3, %s457
      $region52: #{model_forward.9} parent=47 // pred_fallthru
        _
    $region48: #{model_forward.9} parent=5 // pred_fallthru
      _
  $region6: #{model_forward.9} parent=0 // loop_footer
    %s13 = sadd.s32 1, %s9
  $region7: #{model_forward.9} parent=0 // loop_footer_branch
    %8 = sbr.rel target = $region3
  $region8: #{model_forward.9} parent=0 // loop_exit
    _

// kernel: model_forward.6
$region0: #{model_forward.6}
  #allocation0 [shape = 'u32[]', space=smem, size = 0x4, offset = 0x4, fixed_abs, tag = 'smem constant byte address 0x4 - core index']
  #allocation1 [shape = 'u32[144,128]{1,0:T(1,128)}', space=vmem, size = 0x12000, scoped, tag = 'internal scratch']
  #allocation2 [shape = 'f32[8,128]{1,0:T(8,128)}', space=vmem, size = 0x1000, scoped, tag = 'scratch operand']
  %s0 = inlined_call_operand.vmem [shape: bf16[8,8,128], index: 0, kind: input, shape index: {}]
  %s1 = inlined_call_operand.vmem [shape: bf16[128,128], index: 1, kind: input, shape index: {}]
  %s2 = inlined_call_operand.vmem [shape: bf16[8,8,128], index: 2, kind: output, shape index: {}]
  %s3 = sld [smem:[#allocation0]]
  $region22: #{model_forward.6} parent=0
    _
  %s5 = ssub.s32 1, %s3
  %s6 = scalar_select 0, %s5, %s3
  // Predicated region
  $region2: #{model_forward.6} parent=0 // pred_check
    _
  $region3: #{model_forward.6} parent=0 // pred_check_branch
    %8 = sbr.rel (0) target = $region5
  $region4: #{model_forward.6} parent=0 // pred_region
    _
  $region5: #{model_forward.6} parent=0 // pred_fallthru
    _
  // Predicated region
  $region6: #{model_forward.6} parent=0 // pred_check
    _
  $region7: #{model_forward.6} parent=0 // pred_check_branch
    %10 = sbr.rel (0) target = $region9
  $region8: #{model_forward.6} parent=0 // pred_region
    _
  $region9: #{model_forward.6} parent=0 // pred_fallthru
    _
  %p12 = scmp.eq.s32.totalorder 0, 0
  // Predicated region
  $region10: #{model_forward.6} parent=0 // pred_check
    %p13 = pneg %p12
  $region11: #{model_forward.6} parent=0 // pred_check_branch
    %15 = sbr.rel (%p13) target = $region13
  $region12: #{model_forward.6} parent=0 // pred_region
    %16 = vst [vmem:[#allocation2] sm:$0xff] 0.0
  $region13: #{model_forward.6} parent=0 // pred_fallthru
    _
  %v17 = vld [vmem:[%s1] sm:$0xf]
  %v18 = vld [vmem:[%s1 + $0x4] sm:$0xf]
  %v19 = vld [vmem:[%s1 + $0x8] sm:$0xf]
  %v20 = vld [vmem:[%s1 + $0xc] sm:$0xf]
  %v21 = vld [vmem:[%s1 + $0x10] sm:$0xf]
  %v22 = vld [vmem:[%s1 + $0x14] sm:$0xf]
  %v23 = vld [vmem:[%s1 + $0x18] sm:$0xf]
  %v24 = vld [vmem:[%s1 + $0x1c] sm:$0xf]
  %v25 = vld [vmem:[%s1 + $0x20] sm:$0xf]
  %v26 = vld [vmem:[%s1 + $0x24] sm:$0xf]
  %v27 = vld [vmem:[%s1 + $0x28] sm:$0xf]
  %v28 = vld [vmem:[%s1 + $0x2c] sm:$0xf]
  %v29 = vld [vmem:[%s1 + $0x30] sm:$0xf]
  %v30 = vld [vmem:[%s1 + $0x34] sm:$0xf]
  %v31 = vld [vmem:[%s1 + $0x38] sm:$0xf]
  %v32 = vld [vmem:[%s1 + $0x3c] sm:$0xf]
  %v33 = vld [vmem:[#allocation2] sm:$0xff]
  %v34 = vld [vmem:[%s0] sm:$0xf]
  %v35 = vunpack.c.l.bf16 %v34
  %v36 = vpack.c.bf16 %v33, %v33
  %v53 = vunpack.c.l.b16 %v17
  %v54 = vunpack.c.l.b16 %v18
  %v55 = vunpack.c.l.b16 %v19
  %v56 = vunpack.c.l.b16 %v20
  %v57 = vunpack.c.l.b16 %v21
  %v58 = vunpack.c.l.b16 %v22
  %v59 = vunpack.c.l.b16 %v23
  %v60 = vunpack.c.l.b16 %v24
  %v61 = vunpack.c.l.b16 %v25
  %v62 = vunpack.c.l.b16 %v26
  %v63 = vunpack.c.l.b16 %v27
  %v64 = vunpack.c.l.b16 %v28
  %v65 = vunpack.c.l.b16 %v29
  %v66 = vunpack.c.l.b16 %v30
  %v67 = vunpack.c.l.b16 %v31
  %v68 = vunpack.c.l.b16 %v32
  %v69 = vpack.c.b16 %v54, %v53
  %v70 = vpack.c.b16 %v56, %v55
  %v71 = vpack.c.b16 %v58, %v57
  %v72 = vpack.c.b16 %v60, %v59
  %v73 = vpack.c.b16 %v62, %v61
  %v74 = vpack.c.b16 %v64, %v63
  %v75 = vpack.c.b16 %v66, %v65
  %v76 = vpack.c.b16 %v68, %v67
  %85 = vmatprep.subr.bf16.mxu0 0
  %86 = vmatpush1.bf16.msra.mxu0 %v69
  %87 = vmatprep.subr.bf16.mxu0 0
  %88 = vmatpush1.bf16.msra.mxu0 %v70
  %89 = vmatprep.subr.bf16.mxu0 0
  %90 = vmatpush1.bf16.msra.mxu0 %v71
  %91 = vmatprep.subr.bf16.mxu0 0
  %92 = vmatpush1.bf16.msra.mxu0 %v72
  %93 = vmatprep.subr.bf16.mxu0 0
  %94 = vmatpush1.bf16.msra.mxu0 %v73
  %95 = vmatprep.subr.bf16.mxu0 0
  %96 = vmatpush1.bf16.msra.mxu0 %v74
  %97 = vmatprep.subr.bf16.mxu0 0
  %98 = vmatpush1.bf16.msra.mxu0 %v75
  %99 = vmatprep.subr.bf16.mxu0 0
  %100 = vmatpush1.bf16.msra.mxu0 %v76
  %101 = vmatprep.subr.bf16.mxu0 0
  %102 = vmatpush1.bf16.msra.mxu0 0
  %103 = vmatprep.subr.bf16.mxu0 0
  %104 = vmatpush1.bf16.msra.mxu0 0
  %105 = vmatprep.subr.bf16.mxu0 0
  %106 = vmatpush1.bf16.msra.mxu0 0
  %107 = vmatprep.subr.bf16.mxu0 0
  %108 = vmatpush1.bf16.msra.mxu0 0
  %109 = vmatprep.subr.bf16.mxu0 0
  %110 = vmatpush1.bf16.msra.mxu0 0
  %111 = vmatprep.subr.bf16.mxu0 0
  %112 = vmatpush1.bf16.msra.mxu0 0
  %113 = vmatprep.subr.bf16.mxu0 0
  %114 = vmatpush1.bf16.msra.mxu0 0
  %115 = vmatprep.subr.bf16.mxu0 0
  %116 = vmatpush1.bf16.msra.mxu0 0
  %117 = vmatprep.mubr.bf16.mxu0 0
  %118 = vmatmul.mubr.bf16.gmra.mrb[0].mxu0 %v36
  %v119 = vpop.f32.mrb[0].mxu0
  %v120 = vadd.f32 0.0, %v119
  %v121 = vpop.f32.mrb[0].mxu0
  %v122 = vpop.f32.mrb[0].mxu0
  %v123 = vpop.f32.mrb[0].mxu0
  %124 = vdwg.mxu0
  %v125 = vadd.f32 %v35, %v120
  %v126 = vtanh.pop %v125
  %v127 = vpack.c.bf16 %v126, %v126
  %128 = vst [vmem:[%s2] sm:$0xf] %v127
  %s129 = scalar_lea.vmem %s0, 4
  %v130 = vld [vmem:[%s129] sm:$0xf]
  %v131 = vunpack.c.l.bf16 %v130
  %132 = vmatprep.subr.bf16.mxu0 0
  %133 = vmatpush1.bf16.msra.mxu0 %v69
  %134 = vmatprep.subr.bf16.mxu0 0
  %135 = vmatpush1.bf16.msra.mxu0 %v70
  %136 = vmatprep.subr.bf16.mxu0 0
  %137 = vmatpush1.bf16.msra.mxu0 %v71
  %138 = vmatprep.subr.bf16.mxu0 0
  %139 = vmatpush1.bf16.msra.mxu0 %v72
  %140 = vmatprep.subr.bf16.mxu0 0
  %141 = vmatpush1.bf16.msra.mxu0 %v73
  %142 = vmatprep.subr.bf16.mxu0 0
  %143 = vmatpush1.bf16.msra.mxu0 %v74
  %144 = vmatprep.subr.bf16.mxu0 0
  %145 = vmatpush1.bf16.msra.mxu0 %v75
  %146 = vmatprep.subr.bf16.mxu0 0
  %147 = vmatpush1.bf16.msra.mxu0 %v76
  %148 = vmatprep.subr.bf16.mxu0 0
  %149 = vmatpush1.bf16.msra.mxu0 0
  %150 = vmatprep.subr.bf16.mxu0 0
  %151 = vmatpush1.bf16.msra.mxu0 0
  %152 = vmatprep.subr.bf16.mxu0 0
  %153 = vmatpush1.bf16.msra.mxu0 0
  %154 = vmatprep.subr.bf16.mxu0 0
  %155 = vmatpush1.bf16.msra.mxu0 0
  %156 = vmatprep.subr.bf16.mxu0 0
  %157 = vmatpush1.bf16.msra.mxu0 0
  %158 = vmatprep.subr.bf16.mxu0 0
  %159 = vmatpush1.bf16.msra.mxu0 0
  %160 = vmatprep.subr.bf16.mxu0 0
  %161 = vmatpush1.bf16.msra.mxu0 0
  %162 = vmatprep.subr.bf16.mxu0 0
  %163 = vmatpush1.bf16.msra.mxu0 0
  %164 = vmatprep.mubr.bf16.mxu0 0
  %165 = vmatmul.mubr.bf16.gmra.mrb[0].mxu0 %v127
  %v166 = vpop.f32.mrb[0].mxu0
  %v167 = vadd.f32 0.0, %v166
  %v168 = vpop.f32.mrb[0].mxu0
  %v169 = vpop.f32.mrb[0].mxu0
  %v170 = vpop.f32.mrb[0].mxu0
  %171 = vdwg.mxu0
  %v172 = vadd.f32 %v131, %v167
  %v173 = vtanh.pop %v172
  %v174 = vpack.c.bf16 %v173, %v173
  %s175 = scalar_lea.vmem %s2, 4
  %176 = vst [vmem:[%s175] sm:$0xf] %v174
  %s177 = scalar_lea.vmem %s0, 8
  %v178 = vld [vmem:[%s177] sm:$0xf]
  %v179 = vunpack.c.l.bf16 %v178
  %180 = vmatprep.subr.bf16.mxu0 0
  %181 = vmatpush1.bf16.msra.mxu0 %v69
  %182 = vmatprep.subr.bf16.mxu0 0
  %183 = vmatpush1.bf16.msra.mxu0 %v70
  %184 = vmatprep.subr.bf16.mxu0 0
  %185 = vmatpush1.bf16.msra.mxu0 %v71
  %186 = vmatprep.subr.bf16.mxu0 0
  %187 = vmatpush1.bf16.msra.mxu0 %v72
  %188 = vmatprep.subr.bf16.mxu0 0
  %189 = vmatpush1.bf16.msra.mxu0 %v73
  %190 = vmatprep.subr.bf16.mxu0 0
  %191 = vmatpush1.bf16.msra.mxu0 %v74
  %192 = vmatprep.subr.bf16.mxu0 0
  %193 = vmatpush1.bf16.msra.mxu0 %v75
  %194 = vmatprep.subr.bf16.mxu0 0
  %195 = vmatpush1.bf16.msra.mxu0 %v76
  %196 = vmatprep.subr.bf16.mxu0 0
  %197 = vmatpush1.bf16.msra.mxu0 0
  %198 = vmatprep.subr.bf16.mxu0 0
  %199 = vmatpush1.bf16.msra.mxu0 0
  %200 = vmatprep.subr.bf16.mxu0 0
  %201 = vmatpush1.bf16.msra.mxu0 0
  %202 = vmatprep.subr.bf16.mxu0 0
  %203 = vmatpush1.bf16.msra.mxu0 0
  %204 = vmatprep.subr.bf16.mxu0 0
  %205 = vmatpush1.bf16.msra.mxu0 0
  %206 = vmatprep.subr.bf16.mxu0 0
  %207 = vmatpush1.bf16.msra.mxu0 0
  %208 = vmatprep.subr.bf16.mxu0 0
  %209 = vmatpush1.bf16.msra.mxu0 0
  %210 = vmatprep.subr.bf16.mxu0 0
  %211 = vmatpush1.bf16.msra.mxu0 0
  %212 = vmatprep.mubr.bf16.mxu0 0
  %213 = vmatmul.mubr.bf16.gmra.mrb[0].mxu0 %v174
  %v214 = vpop.f32.mrb[0].mxu0
  %v215 = vadd.f32 0.0, %v214
  %v216 = vpop.f32.mrb[0].mxu0
  %v217 = vpop.f32.mrb[0].mxu0
  %v218 = vpop.f32.mrb[0].mxu0
  %219 = vdwg.mxu0
  %v220 = vadd.f32 %v179, %v215
  %v221 = vtanh.pop %v220
  %v222 = vpack.c.bf16 %v221, %v221
  %s223 = scalar_lea.vmem %s2, 8
  %224 = vst [vmem:[%s223] sm:$0xf] %v222
  %s225 = scalar_lea.vmem %s0, 12
  %v226 = vld [vmem:[%s225] sm:$0xf]
  %v227 = vunpack.c.l.bf16 %v226
  %228 = vmatprep.subr.bf16.mxu0 0
  %229 = vmatpush1.bf16.msra.mxu0 %v69
  %230 = vmatprep.subr.bf16.mxu0 0
  %231 = vmatpush1.bf16.msra.mxu0 %v70
  %232 = vmatprep.subr.bf16.mxu0 0
  %233 = vmatpush1.bf16.msra.mxu0 %v71
  %234 = vmatprep.subr.bf16.mxu0 0
  %235 = vmatpush1.bf16.msra.mxu0 %v72
  %236 = vmatprep.subr.bf16.mxu0 0
  %237 = vmatpush1.bf16.msra.mxu0 %v73
  %238 = vmatprep.subr.bf16.mxu0 0
  %239 = vmatpush1.bf16.msra.mxu0 %v74
  %240 = vmatprep.subr.bf16.mxu0 0
  %241 = vmatpush1.bf16.msra.mxu0 %v75
  %242 = vmatprep.subr.bf16.mxu0 0
  %243 = vmatpush1.bf16.msra.mxu0 %v76
  %244 = vmatprep.subr.bf16.mxu0 0
  %245 = vmatpush1.bf16.msra.mxu0 0
  %246 = vmatprep.subr.bf16.mxu0 0
  %247 = vmatpush1.bf16.msra.mxu0 0
  %248 = vmatprep.subr.bf16.mxu0 0
  %249 = vmatpush1.bf16.msra.mxu0 0
  %250 = vmatprep.subr.bf16.mxu0 0
  %251 = vmatpush1.bf16.msra.mxu0 0
  %252 = vmatprep.subr.bf16.mxu0 0
  %253 = vmatpush1.bf16.msra.mxu0 0
  %254 = vmatprep.subr.bf16.mxu0 0
  %255 = vmatpush1.bf16.msra.mxu0 0
  %256 = vmatprep.subr.bf16.mxu0 0
  %257 = vmatpush1.bf16.msra.mxu0 0
  %258 = vmatprep.subr.bf16.mxu0 0
  %259 = vmatpush1.bf16.msra.mxu0 0
  %260 = vmatprep.mubr.bf16.mxu0 0
  %261 = vmatmul.mubr.bf16.gmra.mrb[0].mxu0 %v222
  %v262 = vpop.f32.mrb[0].mxu0
  %v263 = vadd.f32 0.0, %v262
  %v264 = vpop.f32.mrb[0].mxu0
  %v265 = vpop.f32.mrb[0].mxu0
  %v266 = vpop.f32.mrb[0].mxu0
  %267 = vdwg.mxu0
  %v268 = vadd.f32 %v227, %v263
  %v269 = vtanh.pop %v268
  %v270 = vpack.c.bf16 %v269, %v269
  %s271 = scalar_lea.vmem %s2, 12
  %272 = vst [vmem:[%s271] sm:$0xf] %v270
  %s273 = scalar_lea.vmem %s0, 16
  %v274 = vld [vmem:[%s273] sm:$0xf]
  %v275 = vunpack.c.l.bf16 %v274
  %276 = vmatprep.subr.bf16.mxu0 0
  %277 = vmatpush1.bf16.msra.mxu0 %v69
  %278 = vmatprep.subr.bf16.mxu0 0
  %279 = vmatpush1.bf16.msra.mxu0 %v70
  %280 = vmatprep.subr.bf16.mxu0 0
  %281 = vmatpush1.bf16.msra.mxu0 %v71
  %282 = vmatprep.subr.bf16.mxu0 0
  %283 = vmatpush1.bf16.msra.mxu0 %v72
  %284 = vmatprep.subr.bf16.mxu0 0
  %285 = vmatpush1.bf16.msra.mxu0 %v73
  %286 = vmatprep.subr.bf16.mxu0 0
  %287 = vmatpush1.bf16.msra.mxu0 %v74
  %288 = vmatprep.subr.bf16.mxu0 0
  %289 = vmatpush1.bf16.msra.mxu0 %v75
  %290 = vmatprep.subr.bf16.mxu0 0
  %291 = vmatpush1.bf16.msra.mxu0 %v76
  %292 = vmatprep.subr.bf16.mxu0 0
  %293 = vmatpush1.bf16.msra.mxu0 0
  %294 = vmatprep.subr.bf16.mxu0 0
  %295 = vmatpush1.bf16.msra.mxu0 0
  %296 = vmatprep.subr.bf16.mxu0 0
  %297 = vmatpush1.bf16.msra.mxu0 0
  %298 = vmatprep.subr.bf16.mxu0 0
  %299 = vmatpush1.bf16.msra.mxu0 0
  %300 = vmatprep.subr.bf16.mxu0 0
  %301 = vmatpush1.bf16.msra.mxu0 0
  %302 = vmatprep.subr.bf16.mxu0 0
  %303 = vmatpush1.bf16.msra.mxu0 0
  %304 = vmatprep.subr.bf16.mxu0 0
  %305 = vmatpush1.bf16.msra.mxu0 0
  %306 = vmatprep.subr.bf16.mxu0 0
  %307 = vmatpush1.bf16.msra.mxu0 0
  %308 = vmatprep.mubr.bf16.mxu0 0
  %309 = vmatmul.mubr.bf16.gmra.mrb[0].mxu0 %v270
  %v310 = vpop.f32.mrb[0].mxu0
  %v311 = vadd.f32 0.0, %v310
  %v312 = vpop.f32.mrb[0].mxu0
  %v313 = vpop.f32.mrb[0].mxu0
  %v314 = vpop.f32.mrb[0].mxu0
  %315 = vdwg.mxu0
  %v316 = vadd.f32 %v275, %v311
  %v317 = vtanh.pop %v316
  %v318 = vpack.c.bf16 %v317, %v317
  %s319 = scalar_lea.vmem %s2, 16
  %320 = vst [vmem:[%s319] sm:$0xf] %v318
  %s321 = scalar_lea.vmem %s0, 20
  %v322 = vld [vmem:[%s321] sm:$0xf]
  %v323 = vunpack.c.l.bf16 %v322
  %324 = vmatprep.subr.bf16.mxu0 0
  %325 = vmatpush1.bf16.msra.mxu0 %v69
  %326 = vmatprep.subr.bf16.mxu0 0
  %327 = vmatpush1.bf16.msra.mxu0 %v70
  %328 = vmatprep.subr.bf16.mxu0 0
  %329 = vmatpush1.bf16.msra.mxu0 %v71
  %330 = vmatprep.subr.bf16.mxu0 0
  %331 = vmatpush1.bf16.msra.mxu0 %v72
  %332 = vmatprep.subr.bf16.mxu0 0
  %333 = vmatpush1.bf16.msra.mxu0 %v73
  %334 = vmatprep.subr.bf16.mxu0 0
  %335 = vmatpush1.bf16.msra.mxu0 %v74
  %336 = vmatprep.subr.bf16.mxu0 0
  %337 = vmatpush1.bf16.msra.mxu0 %v75
  %338 = vmatprep.subr.bf16.mxu0 0
  %339 = vmatpush1.bf16.msra.mxu0 %v76
  %340 = vmatprep.subr.bf16.mxu0 0
  %341 = vmatpush1.bf16.msra.mxu0 0
  %342 = vmatprep.subr.bf16.mxu0 0
  %343 = vmatpush1.bf16.msra.mxu0 0
  %344 = vmatprep.subr.bf16.mxu0 0
  %345 = vmatpush1.bf16.msra.mxu0 0
  %346 = vmatprep.subr.bf16.mxu0 0
  %347 = vmatpush1.bf16.msra.mxu0 0
  %348 = vmatprep.subr.bf16.mxu0 0
  %349 = vmatpush1.bf16.msra.mxu0 0
  %350 = vmatprep.subr.bf16.mxu0 0
  %351 = vmatpush1.bf16.msra.mxu0 0
  %352 = vmatprep.subr.bf16.mxu0 0
  %353 = vmatpush1.bf16.msra.mxu0 0
  %354 = vmatprep.subr.bf16.mxu0 0
  %355 = vmatpush1.bf16.msra.mxu0 0
  %356 = vmatprep.mubr.bf16.mxu0 0
  %357 = vmatmul.mubr.bf16.gmra.mrb[0].mxu0 %v318
  %v358 = vpop.f32.mrb[0].mxu0
  %v359 = vadd.f32 0.0, %v358
  %v360 = vpop.f32.mrb[0].mxu0
  %v361 = vpop.f32.mrb[0].mxu0
  %v362 = vpop.f32.mrb[0].mxu0
  %363 = vdwg.mxu0
  %v364 = vadd.f32 %v323, %v359
  %v365 = vtanh.pop %v364
  %v366 = vpack.c.bf16 %v365, %v365
  %s367 = scalar_lea.vmem %s2, 20
  %368 = vst [vmem:[%s367] sm:$0xf] %v366
  %s369 = scalar_lea.vmem %s0, 24
  %v370 = vld [vmem:[%s369] sm:$0xf]
  %v371 = vunpack.c.l.bf16 %v370
  %372 = vmatprep.subr.bf16.mxu0 0
  %373 = vmatpush1.bf16.msra.mxu0 %v69
  %374 = vmatprep.subr.bf16.mxu0 0
  %375 = vmatpush1.bf16.msra.mxu0 %v70
  %376 = vmatprep.subr.bf16.mxu0 0
  %377 = vmatpush1.bf16.msra.mxu0 %v71
  %378 = vmatprep.subr.bf16.mxu0 0
  %379 = vmatpush1.bf16.msra.mxu0 %v72
  %380 = vmatprep.subr.bf16.mxu0 0
  %381 = vmatpush1.bf16.msra.mxu0 %v73
  %382 = vmatprep.subr.bf16.mxu0 0
  %383 = vmatpush1.bf16.msra.mxu0 %v74
  %384 = vmatprep.subr.bf16.mxu0 0
  %385 = vmatpush1.bf16.msra.mxu0 %v75
  %386 = vmatprep.subr.bf16.mxu0 0
  %387 = vmatpush1.bf16.msra.mxu0 %v76
  %388 = vmatprep.subr.bf16.mxu0 0
  %389 = vmatpush1.bf16.msra.mxu0 0
  %390 = vmatprep.subr.bf16.mxu0 0
  %391 = vmatpush1.bf16.msra.mxu0 0
  %392 = vmatprep.subr.bf16.mxu0 0
  %393 = vmatpush1.bf16.msra.mxu0 0
  %394 = vmatprep.subr.bf16.mxu0 0
  %395 = vmatpush1.bf16.msra.mxu0 0
  %396 = vmatprep.subr.bf16.mxu0 0
  %397 = vmatpush1.bf16.msra.mxu0 0
  %398 = vmatprep.subr.bf16.mxu0 0
  %399 = vmatpush1.bf16.msra.mxu0 0
  %400 = vmatprep.subr.bf16.mxu0 0
  %401 = vmatpush1.bf16.msra.mxu0 0
  %402 = vmatprep.subr.bf16.mxu0 0
  %403 = vmatpush1.bf16.msra.mxu0 0
  %404 = vmatprep.mubr.bf16.mxu0 0
  %405 = vmatmul.mubr.bf16.gmra.mrb[0].mxu0 %v366
  %v406 = vpop.f32.mrb[0].mxu0
  %v407 = vadd.f32 0.0, %v406
  %v408 = vpop.f32.mrb[0].mxu0
  %v409 = vpop.f32.mrb[0].mxu0
  %v410 = vpop.f32.mrb[0].mxu0
  %411 = vdwg.mxu0
  %v412 = vadd.f32 %v371, %v407
  %v413 = vtanh.pop %v412
  %v414 = vpack.c.bf16 %v413, %v413
  %s415 = scalar_lea.vmem %s2, 24
  %416 = vst [vmem:[%s415] sm:$0xf] %v414
  %s417 = scalar_lea.vmem %s0, 28
  %v418 = vld [vmem:[%s417] sm:$0xf]
  %v419 = vunpack.c.l.bf16 %v418
  %420 = vmatprep.subr.bf16.mxu0 0
  %421 = vmatpush1.bf16.msra.mxu0 %v69
  %422 = vmatprep.subr.bf16.mxu0 0
  %423 = vmatpush1.bf16.msra.mxu0 %v70
  %424 = vmatprep.subr.bf16.mxu0 0
  %425 = vmatpush1.bf16.msra.mxu0 %v71
  %426 = vmatprep.subr.bf16.mxu0 0
  %427 = vmatpush1.bf16.msra.mxu0 %v72
  %428 = vmatprep.subr.bf16.mxu0 0
  %429 = vmatpush1.bf16.msra.mxu0 %v73
  %430 = vmatprep.subr.bf16.mxu0 0
  %431 = vmatpush1.bf16.msra.mxu0 %v74
  %432 = vmatprep.subr.bf16.mxu0 0
  %433 = vmatpush1.bf16.msra.mxu0 %v75
  %434 = vmatprep.subr.bf16.mxu0 0
  %435 = vmatpush1.bf16.msra.mxu0 %v76
  %436 = vmatprep.subr.bf16.mxu0 0
  %437 = vmatpush1.bf16.msra.mxu0 0
  %438 = vmatprep.subr.bf16.mxu0 0
  %439 = vmatpush1.bf16.msra.mxu0 0
  %440 = vmatprep.subr.bf16.mxu0 0
  %441 = vmatpush1.bf16.msra.mxu0 0
  %442 = vmatprep.subr.bf16.mxu0 0
  %443 = vmatpush1.bf16.msra.mxu0 0
  %444 = vmatprep.subr.bf16.mxu0 0
  %445 = vmatpush1.bf16.msra.mxu0 0
  %446 = vmatprep.subr.bf16.mxu0 0
  %447 = vmatpush1.bf16.msra.mxu0 0
  %448 = vmatprep.subr.bf16.mxu0 0
  %449 = vmatpush1.bf16.msra.mxu0 0
  %450 = vmatprep.subr.bf16.mxu0 0
  %451 = vmatpush1.bf16.msra.mxu0 0
  %452 = vmatprep.mubr.bf16.mxu0 0
  %453 = vmatmul.mubr.bf16.gmra.mrb[0].mxu0 %v414
  %v454 = vpop.f32.mrb[0].mxu0
  %v455 = vadd.f32 0.0, %v454
  %v456 = vpop.f32.mrb[0].mxu0
  %v457 = vpop.f32.mrb[0].mxu0
  %v458 = vpop.f32.mrb[0].mxu0
  %459 = vdwg.mxu0
  %v460 = vadd.f32 %v419, %v455
  %v461 = vtanh.pop %v460
  %v462 = vpack.c.bf16 %v461, %v461
  %s463 = scalar_lea.vmem %s2, 28
  %464 = vst [vmem:[%s463] sm:$0xf] %v462
  %465 = vst [vmem:[#allocation2] sm:$0xff] %v461
  // Predicated region
  $region14: #{model_forward.6} parent=0 // pred_check
    _
  $region15: #{model_forward.6} parent=0 // pred_check_branch
    %467 = sbr.rel (0) target = $region17
  $region16: #{model_forward.6} parent=0 // pred_region
    _
  $region17: #{model_forward.6} parent=0 // pred_fallthru
    _
  // Predicated region
  $region18: #{model_forward.6} parent=0 // pred_check
    _
  $region19: #{model_forward.6} parent=0 // pred_check_branch
    %469 = sbr.rel (0) target = $region21
  $region20: #{model_forward.6} parent=0 // pred_region
    _
  $region21: #{model_forward.6} parent=0 // pred_fallthru
    _

</llo_original>
